<compile_context>
chip_gen: v7x
topology: tpu7x:2x2x1
jax: 0.10.0
libtpu: 0.0.40
codegen_flags: <defaults>
</compile_context>

<pallas_src>
import math
import functools

import jax
import jax.numpy as jnp
from jax import lax
from jax.experimental import pallas as pl
from jax.experimental.pallas import tpu as pltpu


def _round_up(x, m):
    return ((x + m - 1) // m) * m


# ----------------------- fused GCN forward kernel ----------------------------

def gcn_fused_kernel(layer_dims, fpad, *refs):
    """Grid = (node_tiles, edge_tiles).

    Edge axis accumulates  ah = A @ M  into an f32 scratch; at the last edge
    step the whole layer stack is applied to the resident node tile.

    refs = (a_ref, m_ref, norm_ref, h_ref,
            [w1, w2, b, gamma, beta] * n_layers,
            o_ref, acc_ref)
    """
    a_ref, m_ref, norm_ref, h_ref = refs[0], refs[1], refs[2], refs[3]
    o_ref, acc_ref = refs[-2], refs[-1]
    prefs = refs[4:-2]
    n_layers = len(layer_dims)

    k = pl.program_id(1)

    @pl.when(k == 0)
    def _():
        acc_ref[...] = jnp.zeros_like(acc_ref)

    # Edge aggregation on the MXU: acc[n, :] += A_tile @ M_tile  (f32 accum).
    acc_ref[...] += jnp.dot(a_ref[...], m_ref[...],
                            preferred_element_type=jnp.float32)

    @pl.when(k == pl.num_programs(1) - 1)
    def _():
        # ah * norm, cast once to bf16 for the per-layer matmuls.
        ahn = (acc_ref[...] * norm_ref[...]).astype(jnp.bfloat16)
        h = h_ref[...]                      # bf16 (TN, fpad), zero padded

        for l in range(n_layers):
            fout = layer_dims[l][1]
            w1 = prefs[5 * l + 0][...]      # bf16 (fpad, fpad)   acts on h
            w2 = prefs[5 * l + 1][...]      # bf16 (apad, fpad)   acts on ah
            b = prefs[5 * l + 2][...]       # f32  (1, fpad)
            gm = prefs[5 * l + 3][...]      # f32  (1, fpad)
            bt = prefs[5 * l + 4][...]      # f32  (1, fpad)

            # Linear on concat([h, ah]) split into two bf16 matmuls, f32 acc.
            z = (jnp.dot(h, w1, preferred_element_type=jnp.float32)
                 + jnp.dot(ahn, w2, preferred_element_type=jnp.float32)
                 + b)

            # LayerNorm over the real fout lanes only (static lane mask).
            mask = (lax.broadcasted_iota(jnp.int32, (1, fpad), 1)
                    < fout).astype(jnp.float32)
            inv_fout = 1.0 / float(fout)
            mean = jnp.sum(z * mask, axis=-1, keepdims=True) * inv_fout
            diff = (z - mean) * mask
            var = jnp.sum(diff * diff, axis=-1, keepdims=True) * inv_fout
            zn = diff * lax.rsqrt(var + 1e-5)
            zn = zn * gm + bt               # padded lanes stay exactly 0

            act = jnp.maximum(zn, 0.0)      # ReLU (f32)
            if l == n_layers - 1:
                o_ref[...] = act.astype(o_ref.dtype)
            else:
                h = act.astype(jnp.bfloat16)


def gcn_forward_padded(A_pad, M_pad, norm_pad, h_pad, flat_params, layer_dims,
                       *, tn, te, fpad, apad):
    n_pad, e_pad = A_pad.shape
    grid = (n_pad // tn, e_pad // te)

    in_specs = [
        pl.BlockSpec((tn, te), lambda i, k: (i, k)),      # A tile
        pl.BlockSpec((te, apad), lambda i, k: (k, 0)),    # M tile
        pl.BlockSpec((tn, 1), lambda i, k: (i, 0)),       # norm
        pl.BlockSpec((tn, fpad), lambda i, k: (i, 0)),    # h tile
    ]
    for _ in layer_dims:
        in_specs += [
            pl.BlockSpec((fpad, fpad), lambda i, k: (0, 0)),   # W1 (resident)
            pl.BlockSpec((apad, fpad), lambda i, k: (0, 0)),   # W2 (resident)
            pl.BlockSpec((1, fpad), lambda i, k: (0, 0)),      # bias
            pl.BlockSpec((1, fpad), lambda i, k: (0, 0)),      # gamma
            pl.BlockSpec((1, fpad), lambda i, k: (0, 0)),      # beta
        ]

    return pl.pallas_call(
        functools.partial(gcn_fused_kernel, layer_dims, fpad),
        out_shape=jax.ShapeDtypeStruct((n_pad, fpad), jnp.float32),
        grid=grid,
        in_specs=in_specs,
        out_specs=pl.BlockSpec((tn, fpad), lambda i, k: (i, 0)),
        scratch_shapes=[pltpu.VMEM((tn, apad), jnp.float32)],
        compiler_params=pltpu.CompilerParams(
            dimension_semantics=("parallel", "arbitrary")),
    )(A_pad, M_pad, norm_pad, h_pad, *flat_params)


# --------------------------- parameters / model -------------------------------

def init_params(key, layers_dimensions, added_features):
    """Mirror GCN_LAYER.reset_parameters (torch-style [out, in] weights)."""
    params = []
    for i in range(len(layers_dimensions) - 1):
        in_feats = layers_dimensions[i] + added_features
        out_feats = layers_dimensions[i + 1]
        stdv = 1.0 / math.sqrt(in_feats)
        key, kw, kb = jax.random.split(key, 3)
        W = jax.random.uniform(kw, (out_feats, in_feats),
                               minval=-stdv, maxval=stdv, dtype=jnp.float32)
        b = jax.random.uniform(kb, (out_feats,),
                               minval=-stdv, maxval=stdv, dtype=jnp.float32)
        gamma = jnp.ones((out_feats,), jnp.float32)   # LayerNorm affine
        beta = jnp.zeros((out_feats,), jnp.float32)
        params.append((W, b, gamma, beta))
    return params


def prepare_params(params, layers_dimensions, added_features, fpad, apad):
    """Pre-transpose / split / 128-pad / bf16-cast the weights ONCE."""
    prep = []
    for l, (W, b, gamma, beta) in enumerate(params):
        fin = layers_dimensions[l]
        fout = layers_dimensions[l + 1]
        W1 = W[:, :fin].T      # [fin,   fout]  acts on h
        W2 = W[:, fin:].T      # [added, fout]  acts on ah
        w1p = (jnp.zeros((fpad, fpad), jnp.float32)
               .at[:fin, :fout].set(W1).astype(jnp.bfloat16))
        w2p = (jnp.zeros((apad, fpad), jnp.float32)
               .at[:added_features, :fout].set(W2).astype(jnp.bfloat16))
        bp = jnp.zeros((1, fpad), jnp.float32).at[0, :fout].set(b)
        gp = jnp.zeros((1, fpad), jnp.float32).at[0, :fout].set(gamma)
        btp = jnp.zeros((1, fpad), jnp.float32).at[0, :fout].set(beta)
        prep.append((w1p, w2p, bp, gp, btp))
    return prep


def make_forward(layers_dimensions, added_features, *, tn_max=256, te_max=512):
    """Build the jitted class_contrastive_model.forward (concat_hidden=False)."""
    layer_dims = tuple((layers_dimensions[i], layers_dimensions[i + 1])
                       for i in range(len(layers_dimensions) - 1))
    fpad = _round_up(max(layers_dimensions), 128)
    apad = _round_up(added_features, 128)

    @jax.jit
    def forward(prep, h, A, M, norm):
        n, fin0 = h.shape
        e, added = M.shape
        tn = min(tn_max, _round_up(n, 8))
        n_pad = _round_up(n, tn)
        te = min(te_max, _round_up(e, 128))
        e_pad = _round_up(e, te)

        h_pad = (jnp.zeros((n_pad, fpad), jnp.bfloat16)
                 .at[:n, :fin0].set(h.astype(jnp.bfloat16)))
        A_pad = (jnp.zeros((n_pad, e_pad), jnp.bfloat16)
                 .at[:n, :e].set(A.astype(jnp.bfloat16)))
        M_pad = (jnp.zeros((e_pad, apad), jnp.bfloat16)
                 .at[:e, :added].set(M.astype(jnp.bfloat16)))
        norm_pad = (jnp.zeros((n_pad, 1), jnp.float32)
                    .at[:n, :].set(norm.astype(jnp.float32)))

        flat = [x for layer in prep for x in layer]
        out_pad = gcn_forward_padded(A_pad, M_pad, norm_pad, h_pad, flat,
                                     layer_dims, tn=tn, te=te,
                                     fpad=fpad, apad=apad)

        fout_last = layer_dims[-1][1]
        return out_pad[:n, :fout_last]   # dropout = identity at inference

    return forward, fpad, apad


# ------------------------------ references ------------------------------------

def reference_forward_f32(params, layers_dimensions, h, A, M, norm):
    """Pure-JAX f32 reference (exact PyTorch semantics)."""
    for (W, b, gamma, beta) in params:
        ah = (A @ M) * norm
        x = jnp.concatenate([h, ah], axis=1)
        z = x @ W.T + b
        mean = z.mean(-1, keepdims=True)
        var = ((z - mean) ** 2).mean(-1, keepdims=True)
        z = (z - mean) / jnp.sqrt(var + 1e-5)
        z = z * gamma + beta
        h = jnp.maximum(z, 0.0)
    return h


def reference_forward_bf16(params, layers_dimensions, h, A, M, norm):
    """Matched-precision reference (bf16 matmul inputs, f32 accumulation)."""
    ah = jnp.dot(A.astype(jnp.bfloat16), M.astype(jnp.bfloat16),
                 preferred_element_type=jnp.float32)
    ahn = (ah * norm).astype(jnp.bfloat16)
    hb = h.astype(jnp.bfloat16)
    out = None
    for l, (W, b, gamma, beta) in enumerate(params):
        fin = layers_dimensions[l]
        W1 = W[:, :fin].T.astype(jnp.bfloat16)
        W2 = W[:, fin:].T.astype(jnp.bfloat16)
        z = (jnp.dot(hb, W1, preferred_element_type=jnp.float32)
             + jnp.dot(ahn, W2, preferred_element_type=jnp.float32) + b)
        mean = z.mean(-1, keepdims=True)
        var = ((z - mean) ** 2).mean(-1, keepdims=True)
        z = (z - mean) / jnp.sqrt(var + 1e-5)
        z = z * gamma + beta
        out = jnp.maximum(z, 0.0)
        hb = out.astype(jnp.bfloat16)
    return out


# ---------------------------------- main --------------------------------------

if __name__ == "__main__":
    # Small synthetic graph (chosen so both grid axes have >1 tile).
    N = 40                       # nodes
    E = 200                      # edges
    added_features = 24          # edge-feature ('m') dimension
    layers_dimensions = [32, 64, 32]

    root = jax.random.PRNGKey(0)
    k_h, k_m, k_dst, k_params = jax.random.split(root, 4)

    # Node 'Geometric' features.
    h0 = jax.random.normal(k_h, (N, layers_dimensions[0]), dtype=jnp.float32)
    # Edge features 'm'.
    M = jax.random.normal(k_m, (E, added_features), dtype=jnp.float32)
    # Random destination node per edge -> dense aggregation matrix A [N, E].
    dst = jax.random.randint(k_dst, (E,), 0, N)
    A = jnp.zeros((N, E), jnp.float32).at[dst, jnp.arange(E)].set(1.0)
    # Node norm = 1 / in-degree (1 if no incoming edges).
    indeg = A.sum(axis=1, keepdims=True)
    norm = jnp.where(indeg > 0, 1.0 / jnp.maximum(indeg, 1.0), 1.0)

    params = init_params(k_params, layers_dimensions, added_features)

    # Small tile caps so the demo exercises multiple node AND edge tiles.
    forward, fpad, apad = make_forward(layers_dimensions, added_features,
                                       tn_max=32, te_max=128)
    prep = prepare_params(params, layers_dimensions, added_features, fpad, apad)

    out = forward(prep, h0, A, M, norm)
    out = jax.block_until_ready(out)

    assert out.shape == (N, layers_dimensions[-1])

    # Check against a precision-matched (bf16 matmul / f32 accum) reference.
    ref_bf16 = reference_forward_bf16(params, layers_dimensions, h0, A, M, norm)
    assert jnp.allclose(out, ref_bf16, atol=1e-2, rtol=1e-2), \
        "mismatch vs bf16-matched reference"

    # Loose sanity check against the full-f32 reference (bf16 matmul drift).
    ref_f32 = reference_forward_f32(params, layers_dimensions, h0, A, M, norm)
    assert jnp.allclose(out, ref_f32, atol=2e-1, rtol=2e-1), \
        "mismatch vs f32 reference"

    print("KERNEL_OK")
</pallas_src>

<mosaic_0001>
module attributes {stable_mosaic.version = 11 : i64} {
  func.func @gcn_fused_kernel(%arg0: i32, %arg1: i32, %arg2: memref<32x128xbf16, #tpu.memory_space<vmem>>, %arg3: memref<128x128xbf16, #tpu.memory_space<vmem>>, %arg4: memref<32x1xf32, #tpu.memory_space<vmem>>, %arg5: memref<32x128xbf16, #tpu.memory_space<vmem>>, %arg6: memref<128x128xbf16, #tpu.memory_space<vmem>>, %arg7: memref<128x128xbf16, #tpu.memory_space<vmem>>, %arg8: memref<1x128xf32, #tpu.memory_space<vmem>>, %arg9: memref<1x128xf32, #tpu.memory_space<vmem>>, %arg10: memref<1x128xf32, #tpu.memory_space<vmem>>, %arg11: memref<128x128xbf16, #tpu.memory_space<vmem>>, %arg12: memref<128x128xbf16, #tpu.memory_space<vmem>>, %arg13: memref<1x128xf32, #tpu.memory_space<vmem>>, %arg14: memref<1x128xf32, #tpu.memory_space<vmem>>, %arg15: memref<1x128xf32, #tpu.memory_space<vmem>>, %arg16: memref<32x128xf32, #tpu.memory_space<vmem>>, %arg17: memref<32x128xf32, #tpu.memory_space<vmem>>) attributes {dimension_semantics = [#tpu.dimension_semantics<parallel>, #tpu.dimension_semantics<arbitrary>], iteration_bounds = array<i64: 2, 2>, scalar_prefetch = 0 : i64, scratch_operands = 1 : i64, tpu.core_type = #tpu.core_type<tc>, window_params = [{transform_indices = @transform_0, window_bounds = array<i64: 32, 128>}, {transform_indices = @transform_1, window_bounds = array<i64: 128, 128>}, {transform_indices = @transform_2, window_bounds = array<i64: 32, 1>}, {transform_indices = @transform_3, window_bounds = array<i64: 32, 128>}, {pipeline_mode = #tpu.pipeline_mode<synchronous>, transform_indices = @transform_4, window_bounds = array<i64: 128, 128>}, {pipeline_mode = #tpu.pipeline_mode<synchronous>, transform_indices = @transform_5, window_bounds = array<i64: 128, 128>}, {pipeline_mode = #tpu.pipeline_mode<synchronous>, transform_indices = @transform_6, window_bounds = array<i64: 1, 128>}, {pipeline_mode = #tpu.pipeline_mode<synchronous>, transform_indices = @transform_7, window_bounds = array<i64: 1, 128>}, {pipeline_mode = #tpu.pipeline_mode<synchronous>, transform_indices = @transform_8, window_bounds = array<i64: 1, 128>}, {pipeline_mode = #tpu.pipeline_mode<synchronous>, transform_indices = @transform_9, window_bounds = array<i64: 128, 128>}, {pipeline_mode = #tpu.pipeline_mode<synchronous>, transform_indices = @transform_10, window_bounds = array<i64: 128, 128>}, {pipeline_mode = #tpu.pipeline_mode<synchronous>, transform_indices = @transform_11, window_bounds = array<i64: 1, 128>}, {pipeline_mode = #tpu.pipeline_mode<synchronous>, transform_indices = @transform_12, window_bounds = array<i64: 1, 128>}, {pipeline_mode = #tpu.pipeline_mode<synchronous>, transform_indices = @transform_13, window_bounds = array<i64: 1, 128>}, {transform_indices = @transform_14, window_bounds = array<i64: 32, 128>}]} {
    %c0_i32 = arith.constant 0 : i32
    %0 = arith.cmpi eq, %arg1, %c0_i32 : i32
    %1 = arith.extui %0 : i1 to i32
    %c0_i32_0 = arith.constant 0 : i32
    %2 = arith.cmpi ne, %1, %c0_i32_0 : i32
    scf.if %2 {
      %cst_9 = arith.constant 0.000000e+00 : f32
      %12 = vector.broadcast %cst_9 : f32 to vector<32x128xf32>
      %c0_10 = arith.constant 0 : index
      %c0_11 = arith.constant 0 : index
      %13 = vector.load %arg17[%c0_10, %c0_11] : memref<32x128xf32, #tpu.memory_space<vmem>>, vector<32x128xf32>
      tpu.vector_store %arg17[%c0_10, %c0_11], %12 {strides = array<i32>} : memref<32x128xf32, #tpu.memory_space<vmem>>, vector<32x128xf32>,
    } else {
    }
    %c0 = arith.constant 0 : index
    %c0_1 = arith.constant 0 : index
    %3 = vector.load %arg17[%c0, %c0_1] : memref<32x128xf32, #tpu.memory_space<vmem>>, vector<32x128xf32>
    %c0_2 = arith.constant 0 : index
    %c0_3 = arith.constant 0 : index
    %4 = vector.load %arg2[%c0_2, %c0_3] : memref<32x128xbf16, #tpu.memory_space<vmem>>, vector<32x128xbf16>
    %c0_4 = arith.constant 0 : index
    %c0_5 = arith.constant 0 : index
    %5 = vector.load %arg3[%c0_4, %c0_5] : memref<128x128xbf16, #tpu.memory_space<vmem>>, vector<128x128xbf16>
    %cst = arith.constant dense<0.000000e+00> : vector<32x128xf32>
    %6 = tpu.matmul %4, %5, %cst {dimension_numbers = #tpu.dot_dimension_numbers<[1], [0], [0], [1], [0, 0, 1, 1], [], []>} : vector<32x128xbf16>, vector<128x128xbf16>, vector<32x128xf32> -> vector<32x128xf32>
    %7 = arith.addf %3, %6 : vector<32x128xf32>
    %c0_6 = arith.constant 0 : index
    %c0_7 = arith.constant 0 : index
    %8 = vector.load %arg17[%c0_6, %c0_7] : memref<32x128xf32, #tpu.memory_space<vmem>>, vector<32x128xf32>
    tpu.vector_store %arg17[%c0_6, %c0_7], %7 {strides = array<i32>} : memref<32x128xf32, #tpu.memory_space<vmem>>, vector<32x128xf32>,
    %c1_i32 = arith.constant 1 : i32
    %9 = arith.cmpi eq, %arg1, %c1_i32 : i32
    %10 = arith.extui %9 : i1 to i32
    %c0_i32_8 = arith.constant 0 : i32
    %11 = arith.cmpi ne, %10, %c0_i32_8 : i32
    scf.if %11 {
      %c0_9 = arith.constant 0 : index
      %c0_10 = arith.constant 0 : index
      %12 = vector.load %arg17[%c0_9, %c0_10] : memref<32x128xf32, #tpu.memory_space<vmem>>, vector<32x128xf32>
      %c0_11 = arith.constant 0 : index
      %c0_12 = arith.constant 0 : index
      %13 = vector.load %arg4[%c0_11, %c0_12] : memref<32x1xf32, #tpu.memory_space<vmem>>, vector<32x1xf32>
      %14 = vector.broadcast %13 : vector<32x1xf32> to vector<32x128xf32>
      %15 = arith.mulf %12, %14 : vector<32x128xf32>
      %16 = arith.truncf %15 : vector<32x128xf32> to vector<32x128xbf16>
      %c0_13 = arith.constant 0 : index
      %c0_14 = arith.constant 0 : index
      %17 = vector.load %arg5[%c0_13, %c0_14] : memref<32x128xbf16, #tpu.memory_space<vmem>>, vector<32x128xbf16>
      %c0_15 = arith.constant 0 : index
      %c0_16 = arith.constant 0 : index
      %18 = vector.load %arg6[%c0_15, %c0_16] : memref<128x128xbf16, #tpu.memory_space<vmem>>, vector<128x128xbf16>
      %c0_17 = arith.constant 0 : index
      %c0_18 = arith.constant 0 : index
      %19 = vector.load %arg7[%c0_17, %c0_18] : memref<128x128xbf16, #tpu.memory_space<vmem>>, vector<128x128xbf16>
      %c0_19 = arith.constant 0 : index
      %c0_20 = arith.constant 0 : index
      %20 = vector.load %arg8[%c0_19, %c0_20] : memref<1x128xf32, #tpu.memory_space<vmem>>, vector<1x128xf32>
      %c0_21 = arith.constant 0 : index
      %c0_22 = arith.constant 0 : index
      %21 = vector.load %arg9[%c0_21, %c0_22] : memref<1x128xf32, #tpu.memory_space<vmem>>, vector<1x128xf32>
      %c0_23 = arith.constant 0 : index
      %c0_24 = arith.constant 0 : index
      %22 = vector.load %arg10[%c0_23, %c0_24] : memref<1x128xf32, #tpu.memory_space<vmem>>, vector<1x128xf32>
      %cst_25 = arith.constant dense<0.000000e+00> : vector<32x128xf32>
      %23 = tpu.matmul %17, %18, %cst_25 {dimension_numbers = #tpu.dot_dimension_numbers<[1], [0], [0], [1], [0, 0, 1, 1], [], []>} : vector<32x128xbf16>, vector<128x128xbf16>, vector<32x128xf32> -> vector<32x128xf32>
      %cst_26 = arith.constant dense<0.000000e+00> : vector<32x128xf32>
      %24 = tpu.matmul %16, %19, %cst_26 {dimension_numbers = #tpu.dot_dimension_numbers<[1], [0], [0], [1], [0, 0, 1, 1], [], []>} : vector<32x128xbf16>, vector<128x128xbf16>, vector<32x128xf32> -> vector<32x128xf32>
      %25 = arith.addf %23, %24 : vector<32x128xf32>
      %26 = vector.broadcast %20 : vector<1x128xf32> to vector<32x128xf32>
      %27 = arith.addf %25, %26 : vector<32x128xf32>
      %28 = tpu.iota {dimensions = array<i32: 1>} : vector<1x128xi32>
      %c64_i32 = arith.constant 64 : i32
      %29 = vector.broadcast %c64_i32 : i32 to vector<1x128xi32>
      %30 = arith.cmpi slt, %28, %29 : vector<1x128xi32>
      %31 = arith.extui %30 : vector<1x128xi1> to vector<1x128xi32>
      %32 = arith.sitofp %31 : vector<1x128xi32> to vector<1x128xf32>
      %33 = vector.broadcast %32 : vector<1x128xf32> to vector<32x128xf32>
      %34 = arith.mulf %27, %33 : vector<32x128xf32>
      %cst_27 = arith.constant dense<0.000000e+00> : vector<32xf32>
      %35 = vector.multi_reduction <add>, %34, %cst_27 [1] : vector<32x128xf32> to vector<32xf32>
      %36 = vector.shape_cast %35 : vector<32xf32> to vector<32x1xf32>
      %cst_28 = arith.constant 1.562500e-02 : f32
      %37 = vector.broadcast %cst_28 : f32 to vector<32x1xf32>
      %38 = arith.mulf %36, %37 : vector<32x1xf32>
      %39 = vector.broadcast %38 : vector<32x1xf32> to vector<32x128xf32>
      %40 = arith.subf %27, %39 : vector<32x128xf32>
      %41 = vector.broadcast %32 : vector<1x128xf32> to vector<32x128xf32>
      %42 = arith.mulf %40, %41 : vector<32x128xf32>
      %43 = arith.mulf %42, %42 : vector<32x128xf32>
      %cst_29 = arith.constant dense<0.000000e+00> : vector<32xf32>
      %44 = vector.multi_reduction <add>, %43, %cst_29 [1] : vector<32x128xf32> to vector<32xf32>
      %45 = vector.shape_cast %44 : vector<32xf32> to vector<32x1xf32>
      %cst_30 = arith.constant 1.562500e-02 : f32
      %46 = vector.broadcast %cst_30 : f32 to vector<32x1xf32>
      %47 = arith.mulf %45, %46 : vector<32x1xf32>
      %cst_31 = arith.constant 9.99999974E-6 : f32
      %48 = vector.broadcast %cst_31 : f32 to vector<32x1xf32>
      %49 = arith.addf %47, %48 : vector<32x1xf32>
      %50 = math.rsqrt %49 : vector<32x1xf32>
      %51 = vector.broadcast %50 : vector<32x1xf32> to vector<32x128xf32>
      %52 = arith.mulf %42, %51 : vector<32x128xf32>
      %53 = vector.broadcast %21 : vector<1x128xf32> to vector<32x128xf32>
      %54 = arith.mulf %52, %53 : vector<32x128xf32>
      %55 = vector.broadcast %22 : vector<1x128xf32> to vector<32x128xf32>
      %56 = arith.addf %54, %55 : vector<32x128xf32>
      %cst_32 = arith.constant 0.000000e+00 : f32
      %57 = vector.broadcast %cst_32 : f32 to vector<32x128xf32>
      %58 = arith.maximumf %56, %57 : vector<32x128xf32>
      %59 = arith.truncf %58 : vector<32x128xf32> to vector<32x128xbf16>
      %c0_33 = arith.constant 0 : index
      %c0_34 = arith.constant 0 : index
      %60 = vector.load %arg11[%c0_33, %c0_34] : memref<128x128xbf16, #tpu.memory_space<vmem>>, vector<128x128xbf16>
      %c0_35 = arith.constant 0 : index
      %c0_36 = arith.constant 0 : index
      %61 = vector.load %arg12[%c0_35, %c0_36] : memref<128x128xbf16, #tpu.memory_space<vmem>>, vector<128x128xbf16>
      %c0_37 = arith.constant 0 : index
      %c0_38 = arith.constant 0 : index
      %62 = vector.load %arg13[%c0_37, %c0_38] : memref<1x128xf32, #tpu.memory_space<vmem>>, vector<1x128xf32>
      %c0_39 = arith.constant 0 : index
      %c0_40 = arith.constant 0 : index
      %63 = vector.load %arg14[%c0_39, %c0_40] : memref<1x128xf32, #tpu.memory_space<vmem>>, vector<1x128xf32>
      %c0_41 = arith.constant 0 : index
      %c0_42 = arith.constant 0 : index
      %64 = vector.load %arg15[%c0_41, %c0_42] : memref<1x128xf32, #tpu.memory_space<vmem>>, vector<1x128xf32>
      %cst_43 = arith.constant dense<0.000000e+00> : vector<32x128xf32>
      %65 = tpu.matmul %59, %60, %cst_43 {dimension_numbers = #tpu.dot_dimension_numbers<[1], [0], [0], [1], [0, 0, 1, 1], [], []>} : vector<32x128xbf16>, vector<128x128xbf16>, vector<32x128xf32> -> vector<32x128xf32>
      %cst_44 = arith.constant dense<0.000000e+00> : vector<32x128xf32>
      %66 = tpu.matmul %16, %61, %cst_44 {dimension_numbers = #tpu.dot_dimension_numbers<[1], [0], [0], [1], [0, 0, 1, 1], [], []>} : vector<32x128xbf16>, vector<128x128xbf16>, vector<32x128xf32> -> vector<32x128xf32>
      %67 = arith.addf %65, %66 : vector<32x128xf32>
      %68 = vector.broadcast %62 : vector<1x128xf32> to vector<32x128xf32>
      %69 = arith.addf %67, %68 : vector<32x128xf32>
      %70 = tpu.iota {dimensions = array<i32: 1>} : vector<1x128xi32>
      %c32_i32 = arith.constant 32 : i32
      %71 = vector.broadcast %c32_i32 : i32 to vector<1x128xi32>
      %72 = arith.cmpi slt, %70, %71 : vector<1x128xi32>
      %73 = arith.extui %72 : vector<1x128xi1> to vector<1x128xi32>
      %74 = arith.sitofp %73 : vector<1x128xi32> to vector<1x128xf32>
      %75 = vector.broadcast %74 : vector<1x128xf32> to vector<32x128xf32>
      %76 = arith.mulf %69, %75 : vector<32x128xf32>
      %cst_45 = arith.constant dense<0.000000e+00> : vector<32xf32>
      %77 = vector.multi_reduction <add>, %76, %cst_45 [1] : vector<32x128xf32> to vector<32xf32>
      %78 = vector.shape_cast %77 : vector<32xf32> to vector<32x1xf32>
      %cst_46 = arith.constant 3.125000e-02 : f32
      %79 = vector.broadcast %cst_46 : f32 to vector<32x1xf32>
      %80 = arith.mulf %78, %79 : vector<32x1xf32>
      %81 = vector.broadcast %80 : vector<32x1xf32> to vector<32x128xf32>
      %82 = arith.subf %69, %81 : vector<32x128xf32>
      %83 = vector.broadcast %74 : vector<1x128xf32> to vector<32x128xf32>
      %84 = arith.mulf %82, %83 : vector<32x128xf32>
      %85 = arith.mulf %84, %84 : vector<32x128xf32>
      %cst_47 = arith.constant dense<0.000000e+00> : vector<32xf32>
      %86 = vector.multi_reduction <add>, %85, %cst_47 [1] : vector<32x128xf32> to vector<32xf32>
      %87 = vector.shape_cast %86 : vector<32xf32> to vector<32x1xf32>
      %cst_48 = arith.constant 3.125000e-02 : f32
      %88 = vector.broadcast %cst_48 : f32 to vector<32x1xf32>
      %89 = arith.mulf %87, %88 : vector<32x1xf32>
      %cst_49 = arith.constant 9.99999974E-6 : f32
      %90 = vector.broadcast %cst_49 : f32 to vector<32x1xf32>
      %91 = arith.addf %89, %90 : vector<32x1xf32>
      %92 = math.rsqrt %91 : vector<32x1xf32>
      %93 = vector.broadcast %92 : vector<32x1xf32> to vector<32x128xf32>
      %94 = arith.mulf %84, %93 : vector<32x128xf32>
      %95 = vector.broadcast %63 : vector<1x128xf32> to vector<32x128xf32>
      %96 = arith.mulf %94, %95 : vector<32x128xf32>
      %97 = vector.broadcast %64 : vector<1x128xf32> to vector<32x128xf32>
      %98 = arith.addf %96, %97 : vector<32x128xf32>
      %cst_50 = arith.constant 0.000000e+00 : f32
      %99 = vector.broadcast %cst_50 : f32 to vector<32x128xf32>
      %100 = arith.maximumf %98, %99 : vector<32x128xf32>
      %c0_51 = arith.constant 0 : index
      %c0_52 = arith.constant 0 : index
      %101 = vector.load %arg16[%c0_51, %c0_52] : memref<32x128xf32, #tpu.memory_space<vmem>>, vector<32x128xf32>
      tpu.vector_store %arg16[%c0_51, %c0_52], %100 {strides = array<i32>} : memref<32x128xf32, #tpu.memory_space<vmem>>, vector<32x128xf32>,
    } else {
    }
    return
  }
  func.func @transform_0(%arg0: i32, %arg1: i32) -> (i32, i32) {
    %c0_i32 = arith.constant 0 : i32
    return %arg0, %arg1 : i32, i32
  }
  func.func @transform_1(%arg0: i32, %arg1: i32) -> (i32, i32) {
    %c0_i32 = arith.constant 0 : i32
    %c0_i32_0 = arith.constant 0 : i32
    return %arg1, %c0_i32 : i32, i32
  }
  func.func @transform_2(%arg0: i32, %arg1: i32) -> (i32, i32) {
    %c0_i32 = arith.constant 0 : i32
    %c0_i32_0 = arith.constant 0 : i32
    return %arg0, %c0_i32 : i32, i32
  }
  func.func @transform_3(%arg0: i32, %arg1: i32) -> (i32, i32) {
    %c0_i32 = arith.constant 0 : i32
    %c0_i32_0 = arith.constant 0 : i32
    return %arg0, %c0_i32 : i32, i32
  }
  func.func @transform_4(%arg0: i32, %arg1: i32) -> (i32, i32) {
    %c0_i32 = arith.constant 0 : i32
    %c0_i32_0 = arith.constant 0 : i32
    %c0_i32_1 = arith.constant 0 : i32
    return %c0_i32, %c0_i32_0 : i32, i32
  }
  func.func @transform_5(%arg0: i32, %arg1: i32) -> (i32, i32) {
    %c0_i32 = arith.constant 0 : i32
    %c0_i32_0 = arith.constant 0 : i32
    %c0_i32_1 = arith.constant 0 : i32
    return %c0_i32, %c0_i32_0 : i32, i32
  }
  func.func @transform_6(%arg0: i32, %arg1: i32) -> (i32, i32) {
    %c0_i32 = arith.constant 0 : i32
    %c0_i32_0 = arith.constant 0 : i32
    %c0_i32_1 = arith.constant 0 : i32
    return %c0_i32, %c0_i32_0 : i32, i32
  }
  func.func @transform_7(%arg0: i32, %arg1: i32) -> (i32, i32) {
    %c0_i32 = arith.constant 0 : i32
    %c0_i32_0 = arith.constant 0 : i32
    %c0_i32_1 = arith.constant 0 : i32
    return %c0_i32, %c0_i32_0 : i32, i32
  }
  func.func @transform_8(%arg0: i32, %arg1: i32) -> (i32, i32) {
    %c0_i32 = arith.constant 0 : i32
    %c0_i32_0 = arith.constant 0 : i32
    %c0_i32_1 = arith.constant 0 : i32
    return %c0_i32, %c0_i32_0 : i32, i32
  }
  func.func @transform_9(%arg0: i32, %arg1: i32) -> (i32, i32) {
    %c0_i32 = arith.constant 0 : i32
    %c0_i32_0 = arith.constant 0 : i32
    %c0_i32_1 = arith.constant 0 : i32
    return %c0_i32, %c0_i32_0 : i32, i32
  }
  func.func @transform_10(%arg0: i32, %arg1: i32) -> (i32, i32) {
    %c0_i32 = arith.constant 0 : i32
    %c0_i32_0 = arith.constant 0 : i32
    %c0_i32_1 = arith.constant 0 : i32
    return %c0_i32, %c0_i32_0 : i32, i32
  }
  func.func @transform_11(%arg0: i32, %arg1: i32) -> (i32, i32) {
    %c0_i32 = arith.constant 0 : i32
    %c0_i32_0 = arith.constant 0 : i32
    %c0_i32_1 = arith.constant 0 : i32
    return %c0_i32, %c0_i32_0 : i32, i32
  }
  func.func @transform_12(%arg0: i32, %arg1: i32) -> (i32, i32) {
    %c0_i32 = arith.constant 0 : i32
    %c0_i32_0 = arith.constant 0 : i32
    %c0_i32_1 = arith.constant 0 : i32
    return %c0_i32, %c0_i32_0 : i32, i32
  }
  func.func @transform_13(%arg0: i32, %arg1: i32) -> (i32, i32) {
    %c0_i32 = arith.constant 0 : i32
    %c0_i32_0 = arith.constant 0 : i32
    %c0_i32_1 = arith.constant 0 : i32
    return %c0_i32, %c0_i32_0 : i32, i32
  }
  func.func @transform_14(%arg0: i32, %arg1: i32) -> (i32, i32) {
    %c0_i32 = arith.constant 0 : i32
    %c0_i32_0 = arith.constant 0 : i32
    return %arg0, %c0_i32 : i32, i32
  }
}

</mosaic_0001>

<llo_original>
// kernel: forward.1
$region0: #{forward.1}
  #allocation0 [shape = 'u32[]', space=smem, size = 0x4, offset = 0x4, fixed_abs, tag = 'smem constant byte address 0x4 - core index']
  #allocation1 [shape = 'u32[144,128]{1,0:T(1,128)}', space=vmem, size = 0x12000, scoped, tag = 'internal scratch']
  #allocation2 [shape = 'f32[32,128]{1,0:T(8,128)}', space=vmem, size = 0x4000, scoped, tag = 'scratch operand']
  %s0 = inlined_call_operand.vmem [shape: bf16[64,256], index: 0, kind: input, shape index: {}]
  %s1 = inlined_call_operand.vmem [shape: bf16[256,128], index: 1, kind: input, shape index: {}]
  %s2 = inlined_call_operand.vmem [shape: f32[64,1], index: 2, kind: input, shape index: {}]
  %s3 = inlined_call_operand.vmem [shape: bf16[64,128], index: 3, kind: input, shape index: {}]
  %s4 = inlined_call_operand.vmem [shape: bf16[128,128], index: 4, kind: input, shape index: {}]
  %s5 = inlined_call_operand.vmem [shape: bf16[128,128], index: 5, kind: input, shape index: {}]
  %s6 = inlined_call_operand.vmem [shape: f32[1,128], index: 6, kind: input, shape index: {}]
  %s7 = inlined_call_operand.vmem [shape: f32[1,128], index: 7, kind: input, shape index: {}]
  %s8 = inlined_call_operand.vmem [shape: f32[1,128], index: 8, kind: input, shape index: {}]
  %s9 = inlined_call_operand.vmem [shape: bf16[128,128], index: 9, kind: input, shape index: {}]
  %s10 = inlined_call_operand.vmem [shape: bf16[128,128], index: 10, kind: input, shape index: {}]
  %s11 = inlined_call_operand.vmem [shape: f32[1,128], index: 11, kind: input, shape index: {}]
  %s12 = inlined_call_operand.vmem [shape: f32[1,128], index: 12, kind: input, shape index: {}]
  %s13 = inlined_call_operand.vmem [shape: f32[1,128], index: 13, kind: input, shape index: {}]
  %s14 = inlined_call_operand.vmem [shape: f32[64,128], index: 14, kind: output, shape index: {}]
  %s15 = sld [smem:[#allocation0]]
  $region138: #{forward.1} parent=0
    _
  %s17 = ssub.s32 1, %s15
  %s18 = scalar_select 0, %s17, %s15
  $region1: #{forward.1} parent=0
    #allocation3 [shape = 'u8[16384]{0}', space=vmem, size = 0x4000, scoped, tag = 'input window, operand 0']
    loop: start=0, step=1, limit=6
    $region2: #{forward.1} parent=1 // loop_pre_header
      _
    $region3: #{forward.1} parent=1 // loop_header
      %s20 = sphi 0, %s24
      %p21 = scmp.ge.s32.totalorder %s20, 6
      %s27 = sphi 0, %s39
      %s28 = sphi 0, %s35
      %s29 = sphi 0, %s27
      %s30 = sphi 0, %s28
      %s31 = sphi 0, %s29
      %s32 = sphi 0, %s30
      %s44 = sphi 0, %s46
      %s47 = sphi 0, %s44
      %s48 = sphi 0, %s47
      %s64 = sphi 0, %s48
      %s70 = sphi 0, %s72
      %s73 = sphi 0, %s70
      %s74 = sphi 0, %s73
      %s90 = sphi 0, %s74
      %s96 = sphi 0, %s98
      %s99 = sphi 0, %s96
      %s100 = sphi 0, %s99
      %s116 = sphi 0, %s100
      %s122 = sphi 0, %s124
      %s125 = sphi 0, %s122
      %s126 = sphi 0, %s125
      %s142 = sphi 0, %s126
      %s146 = sphi 0, %s146
      %s148 = sphi 0, %s146
      %s149 = sphi 0, %s148
      %s163 = sphi 0, %s149
      %s167 = sphi 0, %s167
      %s169 = sphi 0, %s167
      %s170 = sphi 0, %s169
      %s184 = sphi 0, %s170
      %s188 = sphi 0, %s188
      %s190 = sphi 0, %s188
      %s191 = sphi 0, %s190
      %s205 = sphi 0, %s191
      %s209 = sphi 0, %s209
      %s211 = sphi 0, %s209
      %s212 = sphi 0, %s211
      %s226 = sphi 0, %s212
      %s230 = sphi 0, %s230
      %s232 = sphi 0, %s230
      %s233 = sphi 0, %s232
      %s247 = sphi 0, %s233
      %s251 = sphi 0, %s251
      %s253 = sphi 0, %s251
      %s254 = sphi 0, %s253
      %s268 = sphi 0, %s254
      %s272 = sphi 0, %s272
      %s274 = sphi 0, %s272
      %s275 = sphi 0, %s274
      %s289 = sphi 0, %s275
      %s293 = sphi 0, %s293
      %s295 = sphi 0, %s293
      %s296 = sphi 0, %s295
      %s310 = sphi 0, %s296
      %s314 = sphi 0, %s314
      %s316 = sphi 0, %s314
      %s317 = sphi 0, %s316
      %s331 = sphi 0, %s317
      %s335 = sphi 0, %s335
      %s337 = sphi 0, %s335
      %s338 = sphi 0, %s337
      %s352 = sphi 0, %s338
      %s358 = sphi 0, %s360
      %s361 = sphi 0, %s358
      %s362 = sphi 0, %s361
      %s378 = sphi 0, %s362
    $region4: #{forward.1} parent=1 // loop_header_branch
      %23 = sbr.rel (%p21) target = $region8
    $region5: #{forward.1} parent=1 // loop_body
      %s25 = ssub.s32 %s20, 1
      %s26 = ssub.s32 %s20, 2
      %s33 = sadd.s32 1, %s28
      %p34 = scmp.ge.s32.totalorder %s33, 2
      %s35 = scalar_select %p34, 0, %s33
      %s36 = sadd.s32 1, %s27
      %s37 = scalar_select %p34, %s36, %s27
      %p38 = scmp.ge.s32.totalorder %s37, 2
      %s39 = scalar_select %p38, 0, %s37
      %s40 = ssub.s32 %s27, %s39
      %s41 = ssub.s32 %s28, %s35
      %s42 = sor.u32 %s40, %s41
      %p43 = scmp.eq.s32.totalorder %s42, 0
      %s45 = sadd.s32 %s44, 1
      %s46 = scalar_select %p43, %s44, %s45
      %p49 = pneg %p43
      %p50 = scmp.eq.s32.totalorder %s20, 3
      %p51 = por %p49, %p50
      %p52 = scmp.ne.s32.totalorder %s44, %s47
      %p53 = scmp.eq.s32.totalorder %s20, 0
      %p54 = por %p52, %p53
      %p55 = scmp.ne.s32.totalorder %s44, %s47
      %p56 = scmp.eq.s32.totalorder %s25, 3
      %p57 = por %p55, %p56
      %p58 = scmp.ne.s32.totalorder %s47, %s48
      %p59 = scmp.eq.s32.totalorder %s25, 0
      %p60 = por %p58, %p59
      %p61 = scmp.ne.s32.totalorder %s47, %s48
      %p62 = scmp.eq.s32.totalorder %s26, 3
      %p63 = por %p61, %p62
      %p65 = scmp.ne.s32.totalorder %s48, %s64
      %p66 = scmp.eq.s32.totalorder %s26, 0
      %p67 = por %p65, %p66
      %s68 = ssub.s32 %s28, %s35
      %p69 = scmp.eq.s32.totalorder %s68, 0
      %s71 = sadd.s32 %s70, 1
      %s72 = scalar_select %p69, %s70, %s71
      %p75 = pneg %p69
      %p76 = scmp.eq.s32.totalorder %s20, 3
      %p77 = por %p75, %p76
      %p78 = scmp.ne.s32.totalorder %s70, %s73
      %p79 = scmp.eq.s32.totalorder %s20, 0
      %p80 = por %p78, %p79
      %p81 = scmp.ne.s32.totalorder %s70, %s73
      %p82 = scmp.eq.s32.totalorder %s25, 3
      %p83 = por %p81, %p82
      %p84 = scmp.ne.s32.totalorder %s73, %s74
      %p85 = scmp.eq.s32.totalorder %s25, 0
      %p86 = por %p84, %p85
      %p87 = scmp.ne.s32.totalorder %s73, %s74
      %p88 = scmp.eq.s32.totalorder %s26, 3
      %p89 = por %p87, %p88
      %p91 = scmp.ne.s32.totalorder %s74, %s90
      %p92 = scmp.eq.s32.totalorder %s26, 0
      %p93 = por %p91, %p92
      %s94 = ssub.s32 %s27, %s39
      %p95 = scmp.eq.s32.totalorder %s94, 0
      %s97 = sadd.s32 %s96, 1
      %s98 = scalar_select %p95, %s96, %s97
      %p101 = pneg %p95
      %p102 = scmp.eq.s32.totalorder %s20, 3
      %p103 = por %p101, %p102
      %p104 = scmp.ne.s32.totalorder %s96, %s99
      %p105 = scmp.eq.s32.totalorder %s20, 0
      %p106 = por %p104, %p105
      %p107 = scmp.ne.s32.totalorder %s96, %s99
      %p108 = scmp.eq.s32.totalorder %s25, 3
      %p109 = por %p107, %p108
      %p110 = scmp.ne.s32.totalorder %s99, %s100
      %p111 = scmp.eq.s32.totalorder %s25, 0
      %p112 = por %p110, %p111
      %p113 = scmp.ne.s32.totalorder %s99, %s100
      %p114 = scmp.eq.s32.totalorder %s26, 3
      %p115 = por %p113, %p114
      %p117 = scmp.ne.s32.totalorder %s100, %s116
      %p118 = scmp.eq.s32.totalorder %s26, 0
      %p119 = por %p117, %p118
      %s120 = ssub.s32 %s27, %s39
      %p121 = scmp.eq.s32.totalorder %s120, 0
      %s123 = sadd.s32 %s122, 1
      %s124 = scalar_select %p121, %s122, %s123
      %p127 = pneg %p121
      %p128 = scmp.eq.s32.totalorder %s20, 3
      %p129 = por %p127, %p128
      %p130 = scmp.ne.s32.totalorder %s122, %s125
      %p131 = scmp.eq.s32.totalorder %s20, 0
      %p132 = por %p130, %p131
      %p133 = scmp.ne.s32.totalorder %s122, %s125
      %p134 = scmp.eq.s32.totalorder %s25, 3
      %p135 = por %p133, %p134
      %p136 = scmp.ne.s32.totalorder %s125, %s126
      %p137 = scmp.eq.s32.totalorder %s25, 0
      %p138 = por %p136, %p137
      %p139 = scmp.ne.s32.totalorder %s125, %s126
      %p140 = scmp.eq.s32.totalorder %s26, 3
      %p141 = por %p139, %p140
      %p143 = scmp.ne.s32.totalorder %s126, %s142
      %p144 = scmp.eq.s32.totalorder %s26, 0
      %p145 = por %p143, %p144
      %s147 = sadd.s32 %s146, 1
      %p150 = scmp.eq.s32.totalorder %s20, 3
      %p151 = scmp.ne.s32.totalorder %s146, %s148
      %p152 = scmp.eq.s32.totalorder %s20, 0
      %p153 = por %p151, %p152
      %p154 = scmp.ne.s32.totalorder %s146, %s148
      %p155 = scmp.eq.s32.totalorder %s25, 3
      %p156 = por %p154, %p155
      %p157 = scmp.ne.s32.totalorder %s148, %s149
      %p158 = scmp.eq.s32.totalorder %s25, 0
      %p159 = por %p157, %p158
      %p160 = scmp.ne.s32.totalorder %s148, %s149
      %p161 = scmp.eq.s32.totalorder %s26, 3
      %p162 = por %p160, %p161
      %p164 = scmp.ne.s32.totalorder %s149, %s163
      %p165 = scmp.eq.s32.totalorder %s26, 0
      %p166 = por %p164, %p165
      %s168 = sadd.s32 %s167, 1
      %p171 = scmp.eq.s32.totalorder %s20, 3
      %p172 = scmp.ne.s32.totalorder %s167, %s169
      %p173 = scmp.eq.s32.totalorder %s20, 0
      %p174 = por %p172, %p173
      %p175 = scmp.ne.s32.totalorder %s167, %s169
      %p176 = scmp.eq.s32.totalorder %s25, 3
      %p177 = por %p175, %p176
      %p178 = scmp.ne.s32.totalorder %s169, %s170
      %p179 = scmp.eq.s32.totalorder %s25, 0
      %p180 = por %p178, %p179
      %p181 = scmp.ne.s32.totalorder %s169, %s170
      %p182 = scmp.eq.s32.totalorder %s26, 3
      %p183 = por %p181, %p182
      %p185 = scmp.ne.s32.totalorder %s170, %s184
      %p186 = scmp.eq.s32.totalorder %s26, 0
      %p187 = por %p185, %p186
      %s189 = sadd.s32 %s188, 1
      %p192 = scmp.eq.s32.totalorder %s20, 3
      %p193 = scmp.ne.s32.totalorder %s188, %s190
      %p194 = scmp.eq.s32.totalorder %s20, 0
      %p195 = por %p193, %p194
      %p196 = scmp.ne.s32.totalorder %s188, %s190
      %p197 = scmp.eq.s32.totalorder %s25, 3
      %p198 = por %p196, %p197
      %p199 = scmp.ne.s32.totalorder %s190, %s191
      %p200 = scmp.eq.s32.totalorder %s25, 0
      %p201 = por %p199, %p200
      %p202 = scmp.ne.s32.totalorder %s190, %s191
      %p203 = scmp.eq.s32.totalorder %s26, 3
      %p204 = por %p202, %p203
      %p206 = scmp.ne.s32.totalorder %s191, %s205
      %p207 = scmp.eq.s32.totalorder %s26, 0
      %p208 = por %p206, %p207
      %s210 = sadd.s32 %s209, 1
      %p213 = scmp.eq.s32.totalorder %s20, 3
      %p214 = scmp.ne.s32.totalorder %s209, %s211
      %p215 = scmp.eq.s32.totalorder %s20, 0
      %p216 = por %p214, %p215
      %p217 = scmp.ne.s32.totalorder %s209, %s211
      %p218 = scmp.eq.s32.totalorder %s25, 3
      %p219 = por %p217, %p218
      %p220 = scmp.ne.s32.totalorder %s211, %s212
      %p221 = scmp.eq.s32.totalorder %s25, 0
      %p222 = por %p220, %p221
      %p223 = scmp.ne.s32.totalorder %s211, %s212
      %p224 = scmp.eq.s32.totalorder %s26, 3
      %p225 = por %p223, %p224
      %p227 = scmp.ne.s32.totalorder %s212, %s226
      %p228 = scmp.eq.s32.totalorder %s26, 0
      %p229 = por %p227, %p228
      %s231 = sadd.s32 %s230, 1
      %p234 = scmp.eq.s32.totalorder %s20, 3
      %p235 = scmp.ne.s32.totalorder %s230, %s232
      %p236 = scmp.eq.s32.totalorder %s20, 0
      %p237 = por %p235, %p236
      %p238 = scmp.ne.s32.totalorder %s230, %s232
      %p239 = scmp.eq.s32.totalorder %s25, 3
      %p240 = por %p238, %p239
      %p241 = scmp.ne.s32.totalorder %s232, %s233
      %p242 = scmp.eq.s32.totalorder %s25, 0
      %p243 = por %p241, %p242
      %p244 = scmp.ne.s32.totalorder %s232, %s233
      %p245 = scmp.eq.s32.totalorder %s26, 3
      %p246 = por %p244, %p245
      %p248 = scmp.ne.s32.totalorder %s233, %s247
      %p249 = scmp.eq.s32.totalorder %s26, 0
      %p250 = por %p248, %p249
      %s252 = sadd.s32 %s251, 1
      %p255 = scmp.eq.s32.totalorder %s20, 3
      %p256 = scmp.ne.s32.totalorder %s251, %s253
      %p257 = scmp.eq.s32.totalorder %s20, 0
      %p258 = por %p256, %p257
      %p259 = scmp.ne.s32.totalorder %s251, %s253
      %p260 = scmp.eq.s32.totalorder %s25, 3
      %p261 = por %p259, %p260
      %p262 = scmp.ne.s32.totalorder %s253, %s254
      %p263 = scmp.eq.s32.totalorder %s25, 0
      %p264 = por %p262, %p263
      %p265 = scmp.ne.s32.totalorder %s253, %s254
      %p266 = scmp.eq.s32.totalorder %s26, 3
      %p267 = por %p265, %p266
      %p269 = scmp.ne.s32.totalorder %s254, %s268
      %p270 = scmp.eq.s32.totalorder %s26, 0
      %p271 = por %p269, %p270
      %s273 = sadd.s32 %s272, 1
      %p276 = scmp.eq.s32.totalorder %s20, 3
      %p277 = scmp.ne.s32.totalorder %s272, %s274
      %p278 = scmp.eq.s32.totalorder %s20, 0
      %p279 = por %p277, %p278
      %p280 = scmp.ne.s32.totalorder %s272, %s274
      %p281 = scmp.eq.s32.totalorder %s25, 3
      %p282 = por %p280, %p281
      %p283 = scmp.ne.s32.totalorder %s274, %s275
      %p284 = scmp.eq.s32.totalorder %s25, 0
      %p285 = por %p283, %p284
      %p286 = scmp.ne.s32.totalorder %s274, %s275
      %p287 = scmp.eq.s32.totalorder %s26, 3
      %p288 = por %p286, %p287
      %p290 = scmp.ne.s32.totalorder %s275, %s289
      %p291 = scmp.eq.s32.totalorder %s26, 0
      %p292 = por %p290, %p291
      %s294 = sadd.s32 %s293, 1
      %p297 = scmp.eq.s32.totalorder %s20, 3
      %p298 = scmp.ne.s32.totalorder %s293, %s295
      %p299 = scmp.eq.s32.totalorder %s20, 0
      %p300 = por %p298, %p299
      %p301 = scmp.ne.s32.totalorder %s293, %s295
      %p302 = scmp.eq.s32.totalorder %s25, 3
      %p303 = por %p301, %p302
      %p304 = scmp.ne.s32.totalorder %s295, %s296
      %p305 = scmp.eq.s32.totalorder %s25, 0
      %p306 = por %p304, %p305
      %p307 = scmp.ne.s32.totalorder %s295, %s296
      %p308 = scmp.eq.s32.totalorder %s26, 3
      %p309 = por %p307, %p308
      %p311 = scmp.ne.s32.totalorder %s296, %s310
      %p312 = scmp.eq.s32.totalorder %s26, 0
      %p313 = por %p311, %p312
      %s315 = sadd.s32 %s314, 1
      %p318 = scmp.eq.s32.totalorder %s20, 3
      %p319 = scmp.ne.s32.totalorder %s314, %s316
      %p320 = scmp.eq.s32.totalorder %s20, 0
      %p321 = por %p319, %p320
      %p322 = scmp.ne.s32.totalorder %s314, %s316
      %p323 = scmp.eq.s32.totalorder %s25, 3
      %p324 = por %p322, %p323
      %p325 = scmp.ne.s32.totalorder %s316, %s317
      %p326 = scmp.eq.s32.totalorder %s25, 0
      %p327 = por %p325, %p326
      %p328 = scmp.ne.s32.totalorder %s316, %s317
      %p329 = scmp.eq.s32.totalorder %s26, 3
      %p330 = por %p328, %p329
      %p332 = scmp.ne.s32.totalorder %s317, %s331
      %p333 = scmp.eq.s32.totalorder %s26, 0
      %p334 = por %p332, %p333
      %s336 = sadd.s32 %s335, 1
      %p339 = scmp.eq.s32.totalorder %s20, 3
      %p340 = scmp.ne.s32.totalorder %s335, %s337
      %p341 = scmp.eq.s32.totalorder %s20, 0
      %p342 = por %p340, %p341
      %p343 = scmp.ne.s32.totalorder %s335, %s337
      %p344 = scmp.eq.s32.totalorder %s25, 3
      %p345 = por %p343, %p344
      %p346 = scmp.ne.s32.totalorder %s337, %s338
      %p347 = scmp.eq.s32.totalorder %s25, 0
      %p348 = por %p346, %p347
      %p349 = scmp.ne.s32.totalorder %s337, %s338
      %p350 = scmp.eq.s32.totalorder %s26, 3
      %p351 = por %p349, %p350
      %p353 = scmp.ne.s32.totalorder %s338, %s352
      %p354 = scmp.eq.s32.totalorder %s26, 0
      %p355 = por %p353, %p354
      %s356 = ssub.s32 %s27, %s39
      %p357 = scmp.eq.s32.totalorder %s356, 0
      %s359 = sadd.s32 %s358, 1
      %s360 = scalar_select %p357, %s358, %s359
      %p363 = pneg %p357
      %p364 = scmp.eq.s32.totalorder %s20, 3
      %p365 = por %p363, %p364
      %p366 = scmp.ne.s32.totalorder %s358, %s361
      %p367 = scmp.eq.s32.totalorder %s20, 0
      %p368 = por %p366, %p367
      %p369 = scmp.ne.s32.totalorder %s358, %s361
      %p370 = scmp.eq.s32.totalorder %s25, 3
      %p371 = por %p369, %p370
      %p372 = scmp.ne.s32.totalorder %s361, %s362
      %p373 = scmp.eq.s32.totalorder %s25, 0
      %p374 = por %p372, %p373
      %p375 = scmp.ne.s32.totalorder %s361, %s362
      %p376 = scmp.eq.s32.totalorder %s26, 3
      %p377 = por %p375, %p376
      %p379 = scmp.ne.s32.totalorder %s362, %s378
      %p380 = scmp.eq.s32.totalorder %s26, 0
      %p381 = por %p379, %p380
      %p382 = scmp.le.s32.totalorder 1, %s20
      %p383 = scmp.lt.s32.totalorder %s20, 5
      %p384 = pnand %p382, %p383
      %p385 = pneg %p384
      // Predicated region
      $region9: #{forward.1} parent=5 // pred_check
        _
      $region10: #{forward.1} parent=5 // pred_check_branch
        %387 = sbr.rel (%p384) target = $region12
      $region11: #{forward.1} parent=5 // pred_region
        %s388 = ssub.s32 %s20, 1
        // Predicated region
        $region13: #{forward.1} parent=11 // pred_check
          %p389 = pneg %p159
        $region14: #{forward.1} parent=11 // pred_check_branch
          %391 = sbr.rel (%p389) target = $region16
        $region15: #{forward.1} parent=11 // pred_region
          _
        $region16: #{forward.1} parent=11 // pred_fallthru
          _
        // Predicated region
        $region17: #{forward.1} parent=11 // pred_check
          %p392 = pneg %p180
        $region18: #{forward.1} parent=11 // pred_check_branch
          %394 = sbr.rel (%p392) target = $region20
        $region19: #{forward.1} parent=11 // pred_region
          _
        $region20: #{forward.1} parent=11 // pred_fallthru
          _
        // Predicated region
        $region21: #{forward.1} parent=11 // pred_check
          %p395 = pneg %p201
        $region22: #{forward.1} parent=11 // pred_check_branch
          %397 = sbr.rel (%p395) target = $region24
        $region23: #{forward.1} parent=11 // pred_region
          _
        $region24: #{forward.1} parent=11 // pred_fallthru
          _
        // Predicated region
        $region25: #{forward.1} parent=11 // pred_check
          %p398 = pneg %p222
        $region26: #{forward.1} parent=11 // pred_check_branch
          %400 = sbr.rel (%p398) target = $region28
        $region27: #{forward.1} parent=11 // pred_region
          _
        $region28: #{forward.1} parent=11 // pred_fallthru
          _
        // Predicated region
        $region29: #{forward.1} parent=11 // pred_check
          %p401 = pneg %p243
        $region30: #{forward.1} parent=11 // pred_check_branch
          %403 = sbr.rel (%p401) target = $region32
        $region31: #{forward.1} parent=11 // pred_region
          _
        $region32: #{forward.1} parent=11 // pred_fallthru
          _
        // Predicated region
        $region33: #{forward.1} parent=11 // pred_check
          %p404 = pneg %p264
        $region34: #{forward.1} parent=11 // pred_check_branch
          %406 = sbr.rel (%p404) target = $region36
        $region35: #{forward.1} parent=11 // pred_region
          _
        $region36: #{forward.1} parent=11 // pred_fallthru
          _
        // Predicated region
        $region37: #{forward.1} parent=11 // pred_check
          %p407 = pneg %p285
        $region38: #{forward.1} parent=11 // pred_check_branch
          %409 = sbr.rel (%p407) target = $region40
        $region39: #{forward.1} parent=11 // pred_region
          _
        $region40: #{forward.1} parent=11 // pred_fallthru
          _
        // Predicated region
        $region41: #{forward.1} parent=11 // pred_check
          %p410 = pneg %p306
        $region42: #{forward.1} parent=11 // pred_check_branch
          %412 = sbr.rel (%p410) target = $region44
        $region43: #{forward.1} parent=11 // pred_region
          _
        $region44: #{forward.1} parent=11 // pred_fallthru
          _
        // Predicated region
        $region45: #{forward.1} parent=11 // pred_check
          %p413 = pneg %p327
        $region46: #{forward.1} parent=11 // pred_check_branch
          %415 = sbr.rel (%p413) target = $region48
        $region47: #{forward.1} parent=11 // pred_region
          _
        $region48: #{forward.1} parent=11 // pred_fallthru
          _
        // Predicated region
        $region49: #{forward.1} parent=11 // pred_check
          %p416 = pneg %p348
        $region50: #{forward.1} parent=11 // pred_check_branch
          %418 = sbr.rel (%p416) target = $region52
        $region51: #{forward.1} parent=11 // pred_region
          _
        $region52: #{forward.1} parent=11 // pred_fallthru
          _
      $region12: #{forward.1} parent=5 // pred_fallthru
        _
      %p419 = scmp.lt.s32.totalorder %s20, 4
      // Predicated region
      $region53: #{forward.1} parent=5 // pred_check
        %p420 = pneg %p419
      $region54: #{forward.1} parent=5 // pred_check_branch
        %422 = sbr.rel (%p420) target = $region56
      $region55: #{forward.1} parent=5 // pred_region
        // Predicated region
        $region57: #{forward.1} parent=55 // pred_check
          %p423 = pneg %p54
        $region58: #{forward.1} parent=55 // pred_check_branch
          %425 = sbr.rel (%p423) target = $region60
        $region59: #{forward.1} parent=55 // pred_region
          %s426 = sand.u32 %s44, 1
          %s427 = sand.u32 %s44, 1
          %s428 = smul.addr %s427, 16
          %s429 = scalar_lea.vmem [#allocation3], %s428
          %s430 = smul.u32 4, %s27
          %s431 = smul.addr %s430, 2
          %s432 = sadd.s32 %s28, %s431
          %s433 = smul.addr %s432, 4
          %s434 = scalar_lea.vmem %s0, %s433
          // Predicated region
          $region61: #{forward.1} parent=59 // pred_check
            _
          $region62: #{forward.1} parent=59 // pred_check_branch
            %436 = sbr.rel (0) target = $region64
          $region63: #{forward.1} parent=59 // pred_region
            // Predicated region
            $region65: #{forward.1} parent=63 // pred_check
              _
            $region66: #{forward.1} parent=63 // pred_check_branch
              %438 = sbr.rel target = $region68
            $region67: #{forward.1} parent=63 // pred_region
              // Predicated region
              $region80: #{forward.1} parent=67 // pred_check
                _
              $region81: #{forward.1} parent=67 // pred_check_branch
                %459 = sbr.rel (0) target = $region83
              $region82: #{forward.1} parent=67 // pred_region
                loop: start=0, step=1, limit=1
                $region84: #{forward.1} parent=82 // loop_pre_header
                  _
                $region85: #{forward.1} parent=82 // loop_header
                  %s461 = sphi 0, %s465
                  %p462 = scmp.ge.s32.totalorder %s461, 1
                  %s466 = sphi %s434, %s434
                  %s467 = sphi %s429, %s429
                $region86: #{forward.1} parent=82 // loop_header_branch
                  %464 = sbr.rel (%p462) target = $region90
                $region87: #{forward.1} parent=82 // loop_body
                  _
                $region88: #{forward.1} parent=82 // loop_footer
                  %s465 = sadd.s32 1, %s461
                $region89: #{forward.1} parent=82 // loop_footer_branch
                  %460 = sbr.rel target = $region85
                $region90: #{forward.1} parent=82 // loop_exit
                  _
                loop: start=0, step=1, limit=1
                $region91: #{forward.1} parent=82 // loop_pre_header
                  _
                $region92: #{forward.1} parent=82 // loop_header
                  %s470 = sphi 0, %s474
                  %p471 = scmp.ge.s32.totalorder %s470, 1
                  %s475 = sphi %s434, %s434
                  %s476 = sphi %s429, %s429
                $region93: #{forward.1} parent=82 // loop_header_branch
                  %473 = sbr.rel (%p471) target = $region97
                $region94: #{forward.1} parent=82 // loop_body
                  %v477 = vld [vmem:[%s475] sm:$0xf]
                  %478 = vst [vmem:[%s476] sm:$0xf] %v477
                  %v479 = vld [vmem:[%s475 + $0x8] sm:$0xf]
                  %480 = vst [vmem:[%s476 + $0x4] sm:$0xf] %v479
                  %v481 = vld [vmem:[%s475 + $0x10] sm:$0xf]
                  %482 = vst [vmem:[%s476 + $0x8] sm:$0xf] %v481
                  %v483 = vld [vmem:[%s475 + $0x18] sm:$0xf]
                  %484 = vst [vmem:[%s476 + $0xc] sm:$0xf] %v483
                $region95: #{forward.1} parent=82 // loop_footer
                  %s474 = sadd.s32 1, %s470
                $region96: #{forward.1} parent=82 // loop_footer_branch
                  %469 = sbr.rel target = $region92
                $region97: #{forward.1} parent=82 // loop_exit
                  _
              $region83: #{forward.1} parent=67 // pred_fallthru
                _
            $region68: #{forward.1} parent=63 // pred_fallthru
              _
            // Predicated region
            $region69: #{forward.1} parent=63 // pred_check
              _
            $region70: #{forward.1} parent=63 // pred_check_branch
              %440 = sbr.rel (0) target = $region72
            $region71: #{forward.1} parent=63 // pred_region
              loop: start=0, step=1, limit=1
              $region73: #{forward.1} parent=71 // loop_pre_header
                _
              $region74: #{forward.1} parent=71 // loop_header
                %s443 = sphi 0, %s447
                %p444 = scmp.ge.s32.totalorder %s443, 1
                %s448 = sphi %s434, %s434
                %s449 = sphi %s429, %s429
              $region75: #{forward.1} parent=71 // loop_header_branch
                %446 = sbr.rel (%p444) target = $region79
              $region76: #{forward.1} parent=71 // loop_body
                %v450 = vld [vmem:[%s448] sm:$0xf]
                %451 = vst [vmem:[%s449] sm:$0xf] %v450
                %v452 = vld [vmem:[%s448 + $0x8] sm:$0xf]
                %453 = vst [vmem:[%s449 + $0x4] sm:$0xf] %v452
                %v454 = vld [vmem:[%s448 + $0x10] sm:$0xf]
                %455 = vst [vmem:[%s449 + $0x8] sm:$0xf] %v454
                %v456 = vld [vmem:[%s448 + $0x18] sm:$0xf]
                %457 = vst [vmem:[%s449 + $0xc] sm:$0xf] %v456
              $region77: #{forward.1} parent=71 // loop_footer
                %s447 = sadd.s32 1, %s443
              $region78: #{forward.1} parent=71 // loop_footer_branch
                %442 = sbr.rel target = $region74
              $region79: #{forward.1} parent=71 // loop_exit
                _
            $region72: #{forward.1} parent=63 // pred_fallthru
              _
          $region64: #{forward.1} parent=59 // pred_fallthru
            _
          %485 = vnop
        $region60: #{forward.1} parent=55 // pred_fallthru
          _
        // Predicated region
        $region98: #{forward.1} parent=55 // pred_check
          %p486 = pneg %p80
        $region99: #{forward.1} parent=55 // pred_check_branch
          %488 = sbr.rel (%p486) target = $region101
        $region100: #{forward.1} parent=55 // pred_region
          %s489 = smul.u32 16, %s28
          %p490 = scmp.lt.s32.totalorder %s489, 31
          %s491 = scalar_select %p490, %s489, 31
          %s492 = smul.addr %s491, 4
          %s493 = scalar_lea.vmem %s1, %s492
          %s494 = smul.u32 16, %s28
        $region101: #{forward.1} parent=55 // pred_fallthru
          _
        // Predicated region
        $region102: #{forward.1} parent=55 // pred_check
          %p495 = pneg %p106
        $region103: #{forward.1} parent=55 // pred_check_branch
          %497 = sbr.rel (%p495) target = $region105
        $region104: #{forward.1} parent=55 // pred_region
          %s498 = smul.u32 4, %s27
          %p499 = scmp.lt.s32.totalorder %s498, 7
          %s500 = scalar_select %p499, %s498, 7
          %s501 = smul.addr %s500, 8
          %s502 = scalar_lea.vmem %s2, %s501
          %s503 = smul.u32 4, %s27
        $region105: #{forward.1} parent=55 // pred_fallthru
          _
        // Predicated region
        $region106: #{forward.1} parent=55 // pred_check
          %p504 = pneg %p132
        $region107: #{forward.1} parent=55 // pred_check_branch
          %506 = sbr.rel (%p504) target = $region109
        $region108: #{forward.1} parent=55 // pred_region
          %s507 = smul.u32 4, %s27
          %p508 = scmp.lt.s32.totalorder %s507, 7
          %s509 = scalar_select %p508, %s507, 7
          %s510 = smul.addr %s509, 4
          %s511 = scalar_lea.vmem %s3, %s510
          %s512 = smul.u32 4, %s27
        $region109: #{forward.1} parent=55 // pred_fallthru
          _
      $region56: #{forward.1} parent=5 // pred_fallthru
        _
      %p513 = scmp.le.s32.totalorder 1, %s20
      %p514 = scmp.lt.s32.totalorder %s20, 5
      %p515 = pnand %p513, %p514
      %p516 = pneg %p515
      // Predicated region
      $region110: #{forward.1} parent=5 // pred_check
        _
      $region111: #{forward.1} parent=5 // pred_check_branch
        %518 = sbr.rel (%p515) target = $region113
      $region112: #{forward.1} parent=5 // pred_region
        %s519 = ssub.s32 %s20, 1
        %s520 = sand.u32 %s47, 1
        %s521 = sand.u32 %s47, 1
        %s522 = smul.addr %s521, 16
        %s523 = scalar_lea.vmem [#allocation3], %s522
        // Predicated region
        $region114: #{forward.1} parent=112 // pred_check
          %p524 = pneg %p60
        $region115: #{forward.1} parent=112 // pred_check_branch
          %526 = sbr.rel (%p524) target = $region117
        $region116: #{forward.1} parent=112 // pred_region
          _
        $region117: #{forward.1} parent=112 // pred_fallthru
          _
        %s527 = sand.u32 %s47, 1
        %s528 = sand.u32 %s47, 1
        %s529 = smul.addr %s528, 16
        %s530 = scalar_lea.vmem [#allocation3], %s529
        %p531 = pneg %p60
        %p532 = pneg %p57
        %s533 = smul.u32 16, %s30
        %p534 = scmp.lt.s32.totalorder %s533, 31
        %s535 = scalar_select %p534, %s533, 31
        %s536 = smul.addr %s535, 4
        %s537 = scalar_lea.vmem %s1, %s536
        %p538 = pneg %p86
        %p539 = pneg %p83
        %s540 = smul.u32 4, %s29
        %p541 = scmp.lt.s32.totalorder %s540, 7
        %s542 = scalar_select %p541, %s540, 7
        %s543 = smul.addr %s542, 8
        %s544 = scalar_lea.vmem %s2, %s543
        %p545 = pneg %p112
        %p546 = pneg %p109
        %s547 = smul.u32 4, %s29
        %p548 = scmp.lt.s32.totalorder %s547, 7
        %s549 = scalar_select %p548, %s547, 7
        %s550 = smul.addr %s549, 4
        %s551 = scalar_lea.vmem %s3, %s550
        %p552 = pneg %p138
        %p553 = pneg %p135
        %p554 = pneg %p159
        %p555 = pneg %p156
        %p556 = pneg %p180
        %p557 = pneg %p177
        %p558 = pneg %p201
        %p559 = pneg %p198
        %p560 = pneg %p222
        %p561 = pneg %p219
        %p562 = pneg %p243
        %p563 = pneg %p240
        %p564 = pneg %p264
        %p565 = pneg %p261
        %p566 = pneg %p285
        %p567 = pneg %p282
        %p568 = pneg %p306
        %p569 = pneg %p303
        %p570 = pneg %p327
        %p571 = pneg %p324
        %p572 = pneg %p348
        %p573 = pneg %p345
        %p574 = pneg %p374
        %p575 = pneg %p371
        %s576 = smul.u32 4, %s29
        %p577 = scmp.lt.s32.totalorder %s576, 7
        %s578 = scalar_select %p577, %s576, 7
        %s579 = smul.addr %s578, 8
        %s580 = scalar_lea.vmem %s14, %s579
        %s581 = smul.u32 4, %s29
        %s582 = smul.u32 16, %s30
        %p583 = scmp.lt.s32.totalorder %s582, 31
        %s584 = scalar_select %p583, %s582, 31
        %s585 = smul.addr %s584, 4
        %s586 = scalar_lea.vmem %s1, %s585
        %s587 = smul.u32 16, %s30
        %s588 = smul.u32 4, %s29
        %p589 = scmp.lt.s32.totalorder %s588, 7
        %s590 = scalar_select %p589, %s588, 7
        %s591 = smul.addr %s590, 8
        %s592 = scalar_lea.vmem %s2, %s591
        %s593 = smul.u32 4, %s29
        %s594 = smul.u32 4, %s29
        %p595 = scmp.lt.s32.totalorder %s594, 7
        %s596 = scalar_select %p595, %s594, 7
        %s597 = smul.addr %s596, 4
        %s598 = scalar_lea.vmem %s3, %s597
        %s599 = smul.u32 4, %s29
        %s600 = smul.u32 4, %s29
        %p601 = scmp.lt.s32.totalorder %s600, 7
        %s602 = scalar_select %p601, %s600, 7
        %s603 = smul.addr %s602, 8
        %s604 = scalar_lea.vmem %s14, %s603
        %s605 = smul.u32 4, %s29
        %p607 = scmp.eq.s32.totalorder %s30, 0
        // Predicated region
        $region118: #{forward.1} parent=112 // pred_check
          %p608 = pneg %p607
        $region119: #{forward.1} parent=112 // pred_check_branch
          %610 = sbr.rel (%p608) target = $region121
        $region120: #{forward.1} parent=112 // pred_region
          %611 = vst [vmem:[#allocation2] sm:$0xff] 0.0
          %612 = vst [vmem:[#allocation2 + $0x8] sm:$0xff] 0.0
          %613 = vst [vmem:[#allocation2 + $0x10] sm:$0xff] 0.0
          %614 = vst [vmem:[#allocation2 + $0x18] sm:$0xff] 0.0
        $region121: #{forward.1} parent=112 // pred_fallthru
          _
        %v615 = vld [vmem:[#allocation2] sm:$0xff]
        %v616 = vld [vmem:[#allocation2 + $0x8] sm:$0xff]
        %v617 = vld [vmem:[#allocation2 + $0x10] sm:$0xff]
        %v618 = vld [vmem:[#allocation2 + $0x18] sm:$0xff]
        %v619 = vld [vmem:[%s523] sm:$0xf]
        %v620 = vld [vmem:[%s523 + $0x4] sm:$0xf]
        %v621 = vld [vmem:[%s523 + $0x8] sm:$0xf]
        %v622 = vld [vmem:[%s523 + $0xc] sm:$0xf]
        %v623 = vld [vmem:[%s586] sm:$0xf]
        %v624 = vld [vmem:[%s586 + $0x4] sm:$0xf]
        %v625 = vld [vmem:[%s586 + $0x8] sm:$0xf]
        %v626 = vld [vmem:[%s586 + $0xc] sm:$0xf]
        %v627 = vld [vmem:[%s586 + $0x10] sm:$0xf]
        %v628 = vld [vmem:[%s586 + $0x14] sm:$0xf]
        %v629 = vld [vmem:[%s586 + $0x18] sm:$0xf]
        %v630 = vld [vmem:[%s586 + $0x1c] sm:$0xf]
        %v631 = vld [vmem:[%s586 + $0x20] sm:$0xf]
        %v632 = vld [vmem:[%s586 + $0x24] sm:$0xf]
        %v633 = vld [vmem:[%s586 + $0x28] sm:$0xf]
        %v634 = vld [vmem:[%s586 + $0x2c] sm:$0xf]
        %v635 = vld [vmem:[%s586 + $0x30] sm:$0xf]
        %v636 = vld [vmem:[%s586 + $0x34] sm:$0xf]
        %v637 = vld [vmem:[%s586 + $0x38] sm:$0xf]
        %v638 = vld [vmem:[%s586 + $0x3c] sm:$0xf]
        %v643 = vunpack.c.l.b16 %v619
        %v644 = vunpack.c.l.b16 %v620
        %v645 = vunpack.c.l.b16 %v621
        %v646 = vunpack.c.l.b16 %v622
        %v647 = vpack.c.b16 %v644, %v643
        %v648 = vpack.c.b16 %v646, %v645
        %v667 = vunpack.c.l.b16 %v623
        %v668 = vunpack.c.l.b16 %v624
        %v669 = vunpack.c.l.b16 %v625
        %v670 = vunpack.c.l.b16 %v626
        %v671 = vunpack.c.l.b16 %v627
        %v672 = vunpack.c.l.b16 %v628
        %v673 = vunpack.c.l.b16 %v629
        %v674 = vunpack.c.l.b16 %v630
        %v675 = vunpack.c.l.b16 %v631
        %v676 = vunpack.c.l.b16 %v632
        %v677 = vunpack.c.l.b16 %v633
        %v678 = vunpack.c.l.b16 %v634
        %v679 = vunpack.c.l.b16 %v635
        %v680 = vunpack.c.l.b16 %v636
        %v681 = vunpack.c.l.b16 %v637
        %v682 = vunpack.c.l.b16 %v638
        %v683 = vpack.c.b16 %v668, %v667
        %v684 = vpack.c.b16 %v670, %v669
        %v685 = vpack.c.b16 %v672, %v671
        %v686 = vpack.c.b16 %v674, %v673
        %v687 = vpack.c.b16 %v676, %v675
        %v688 = vpack.c.b16 %v678, %v677
        %v689 = vpack.c.b16 %v680, %v679
        %v690 = vpack.c.b16 %v682, %v681
        %699 = vmatprep.subr.bf16.mxu0 0
        %700 = vmatpush1.bf16.msra.mxu0 %v683
        %701 = vmatprep.subr.bf16.mxu0 0
        %702 = vmatpush1.bf16.msra.mxu0 %v684
        %703 = vmatprep.subr.bf16.mxu0 0
        %704 = vmatpush1.bf16.msra.mxu0 %v685
        %705 = vmatprep.subr.bf16.mxu0 0
        %706 = vmatpush1.bf16.msra.mxu0 %v686
        %707 = vmatprep.subr.bf16.mxu0 0
        %708 = vmatpush1.bf16.msra.mxu0 %v687
        %709 = vmatprep.subr.bf16.mxu0 0
        %710 = vmatpush1.bf16.msra.mxu0 %v688
        %711 = vmatprep.subr.bf16.mxu0 0
        %712 = vmatpush1.bf16.msra.mxu0 %v689
        %713 = vmatprep.subr.bf16.mxu0 0
        %714 = vmatpush1.bf16.msra.mxu0 %v690
        %715 = vmatprep.subr.bf16.mxu0 0
        %716 = vmatpush1.bf16.msra.mxu0 0
        %717 = vmatprep.subr.bf16.mxu0 0
        %718 = vmatpush1.bf16.msra.mxu0 0
        %719 = vmatprep.subr.bf16.mxu0 0
        %720 = vmatpush1.bf16.msra.mxu0 0
        %721 = vmatprep.subr.bf16.mxu0 0
        %722 = vmatpush1.bf16.msra.mxu0 0
        %723 = vmatprep.subr.bf16.mxu0 0
        %724 = vmatpush1.bf16.msra.mxu0 0
        %725 = vmatprep.subr.bf16.mxu0 0
        %726 = vmatpush1.bf16.msra.mxu0 0
        %727 = vmatprep.subr.bf16.mxu0 0
        %728 = vmatpush1.bf16.msra.mxu0 0
        %729 = vmatprep.subr.bf16.mxu0 0
        %730 = vmatpush1.bf16.msra.mxu0 0
        %731 = vmatprep.mubr.bf16.mxu0 0
        %732 = vmatmul.mubr.bf16.gmra.mrb[0].mxu0 %v647
        %v733 = vpop.f32.mrb[0].mxu0
        %v734 = vadd.f32 0.0, %v733
        %v735 = vpop.f32.mrb[0].mxu0
        %v736 = vpop.f32.mrb[0].mxu0
        %v737 = vadd.f32 0.0, %v736
        %v738 = vpop.f32.mrb[0].mxu0
        %739 = vmatprep.mubr.bf16.mxu0 0
        %740 = vmatmul.mubr.bf16.gmra.mrb[0].mxu0 %v648
        %v741 = vpop.f32.mrb[0].mxu0
        %v742 = vadd.f32 0.0, %v741
        %v743 = vpop.f32.mrb[0].mxu0
        %v744 = vpop.f32.mrb[0].mxu0
        %v745 = vadd.f32 0.0, %v744
        %v746 = vpop.f32.mrb[0].mxu0
        %747 = vdwg.mxu0
        %v748 = vadd.f32 %v615, %v734
        %v749 = vadd.f32 %v616, %v737
        %v750 = vadd.f32 %v617, %v742
        %v751 = vadd.f32 %v618, %v745
        %752 = vst [vmem:[#allocation2] sm:$0xff] %v748
        %753 = vst [vmem:[#allocation2 + $0x8] sm:$0xff] %v749
        %754 = vst [vmem:[#allocation2 + $0x10] sm:$0xff] %v750
        %755 = vst [vmem:[#allocation2 + $0x18] sm:$0xff] %v751
        %p756 = scmp.eq.s32.totalorder %s30, 1
        // Predicated region
        $region122: #{forward.1} parent=112 // pred_check
          %p757 = pneg %p756
        $region123: #{forward.1} parent=112 // pred_check_branch
          %759 = sbr.rel (%p757) target = $region125
        $region124: #{forward.1} parent=112 // pred_region
          %v760 = vld [vmem:[#allocation2] sm:$0xff]
          %v761 = vld [vmem:[#allocation2 + $0x8] sm:$0xff]
          %v762 = vld [vmem:[#allocation2 + $0x10] sm:$0xff]
          %v763 = vld [vmem:[#allocation2 + $0x18] sm:$0xff]
          %v764 = vld [vmem:[%s592] sm:$0xff]
          %v765 = vld [vmem:[%s592 + $0x8] sm:$0xff]
          %v766 = vld [vmem:[%s592 + $0x10] sm:$0xff]
          %v767 = vld [vmem:[%s592 + $0x18] sm:$0xff]
          %769 = vset.pattern.permute.xlu0 0
          %770 = vperm.xlu0 %769, %v764
          %v771 = vpop.permute.xlu0 %770
          %774 = vset.pattern.permute.xlu0 0
          %775 = vperm.xlu0 %774, %v765
          %v776 = vpop.permute.xlu0 %775
          %779 = vset.pattern.permute.xlu0 0
          %780 = vperm.xlu0 %779, %v766
          %v781 = vpop.permute.xlu0 %780
          %784 = vset.pattern.permute.xlu0 0
          %785 = vperm.xlu0 %784, %v767
          %v786 = vpop.permute.xlu0 %785
          %v788 = vmul.f32 %v760, %v771
          %v789 = vmul.f32 %v761, %v776
          %v790 = vmul.f32 %v762, %v781
          %v791 = vmul.f32 %v763, %v786
          %v792 = vpack.c.bf16 %v789, %v788
          %v793 = vpack.c.bf16 %v791, %v790
          %v794 = vld [vmem:[%s598] sm:$0xf]
          %v795 = vld [vmem:[%s598 + $0x4] sm:$0xf]
          %v796 = vld [vmem:[%s598 + $0x8] sm:$0xf]
          %v797 = vld [vmem:[%s598 + $0xc] sm:$0xf]
          %v798 = vld [vmem:[%s4] sm:$0xf]
          %v799 = vld [vmem:[%s4 + $0x4] sm:$0xf]
          %v800 = vld [vmem:[%s4 + $0x8] sm:$0xf]
          %v801 = vld [vmem:[%s4 + $0xc] sm:$0xf]
          %v802 = vld [vmem:[%s4 + $0x10] sm:$0xf]
          %v803 = vld [vmem:[%s4 + $0x14] sm:$0xf]
          %v804 = vld [vmem:[%s4 + $0x18] sm:$0xf]
          %v805 = vld [vmem:[%s4 + $0x1c] sm:$0xf]
          %v806 = vld [vmem:[%s4 + $0x20] sm:$0xf]
          %v807 = vld [vmem:[%s4 + $0x24] sm:$0xf]
          %v808 = vld [vmem:[%s4 + $0x28] sm:$0xf]
          %v809 = vld [vmem:[%s4 + $0x2c] sm:$0xf]
          %v810 = vld [vmem:[%s4 + $0x30] sm:$0xf]
          %v811 = vld [vmem:[%s4 + $0x34] sm:$0xf]
          %v812 = vld [vmem:[%s4 + $0x38] sm:$0xf]
          %v813 = vld [vmem:[%s4 + $0x3c] sm:$0xf]
          %v814 = vld [vmem:[%s5] sm:$0xf]
          %v815 = vld [vmem:[%s5 + $0x4] sm:$0xf]
          %v816 = vld [vmem:[%s5 + $0x8] sm:$0xf]
          %v817 = vld [vmem:[%s5 + $0xc] sm:$0xf]
          %v818 = vld [vmem:[%s5 + $0x10] sm:$0xf]
          %v819 = vld [vmem:[%s5 + $0x14] sm:$0xf]
          %v820 = vld [vmem:[%s5 + $0x18] sm:$0xf]
          %v821 = vld [vmem:[%s5 + $0x1c] sm:$0xf]
          %v822 = vld [vmem:[%s5 + $0x20] sm:$0xf]
          %v823 = vld [vmem:[%s5 + $0x24] sm:$0xf]
          %v824 = vld [vmem:[%s5 + $0x28] sm:$0xf]
          %v825 = vld [vmem:[%s5 + $0x2c] sm:$0xf]
          %v826 = vld [vmem:[%s5 + $0x30] sm:$0xf]
          %v827 = vld [vmem:[%s5 + $0x34] sm:$0xf]
          %v828 = vld [vmem:[%s5 + $0x38] sm:$0xf]
          %v829 = vld [vmem:[%s5 + $0x3c] sm:$0xf]
          %v830 = vld [vmem:[%s6] sm:$0x1]
          %v831 = vld [vmem:[%s7] sm:$0x1]
          %v832 = vld [vmem:[%s8] sm:$0x1]
          %v849 = vunpack.c.l.b16 %v814
          %v850 = vunpack.c.l.b16 %v815
          %v851 = vunpack.c.l.b16 %v816
          %v852 = vunpack.c.l.b16 %v817
          %v853 = vunpack.c.l.b16 %v818
          %v854 = vunpack.c.l.b16 %v819
          %v855 = vunpack.c.l.b16 %v820
          %v856 = vunpack.c.l.b16 %v821
          %v857 = vunpack.c.l.b16 %v822
          %v858 = vunpack.c.l.b16 %v823
          %v859 = vunpack.c.l.b16 %v824
          %v860 = vunpack.c.l.b16 %v825
          %v861 = vunpack.c.l.b16 %v826
          %v862 = vunpack.c.l.b16 %v827
          %v863 = vunpack.c.l.b16 %v828
          %v864 = vunpack.c.l.b16 %v829
          %v865 = vpack.c.b16 %v850, %v849
          %v866 = vpack.c.b16 %v852, %v851
          %v867 = vpack.c.b16 %v854, %v853
          %v868 = vpack.c.b16 %v856, %v855
          %v869 = vpack.c.b16 %v858, %v857
          %v870 = vpack.c.b16 %v860, %v859
          %v871 = vpack.c.b16 %v862, %v861
          %v872 = vpack.c.b16 %v864, %v863
          %881 = vmatprep.subr.bf16.mxu0 0
          %882 = vmatpush1.bf16.msra.mxu0 %v865
          %883 = vmatprep.subr.bf16.mxu0 0
          %884 = vmatpush1.bf16.msra.mxu0 %v866
          %885 = vmatprep.subr.bf16.mxu0 0
          %886 = vmatpush1.bf16.msra.mxu0 %v867
          %887 = vmatprep.subr.bf16.mxu0 0
          %888 = vmatpush1.bf16.msra.mxu0 %v868
          %889 = vmatprep.subr.bf16.mxu0 0
          %890 = vmatpush1.bf16.msra.mxu0 %v869
          %891 = vmatprep.subr.bf16.mxu0 0
          %892 = vmatpush1.bf16.msra.mxu0 %v870
          %893 = vmatprep.subr.bf16.mxu0 0
          %894 = vmatpush1.bf16.msra.mxu0 %v871
          %895 = vmatprep.subr.bf16.mxu0 0
          %896 = vmatpush1.bf16.msra.mxu0 %v872
          %897 = vmatprep.subr.bf16.mxu0 0
          %898 = vmatpush1.bf16.msra.mxu0 0
          %899 = vmatprep.subr.bf16.mxu0 0
          %900 = vmatpush1.bf16.msra.mxu0 0
          %901 = vmatprep.subr.bf16.mxu0 0
          %902 = vmatpush1.bf16.msra.mxu0 0
          %903 = vmatprep.subr.bf16.mxu0 0
          %904 = vmatpush1.bf16.msra.mxu0 0
          %905 = vmatprep.subr.bf16.mxu0 0
          %906 = vmatpush1.bf16.msra.mxu0 0
          %907 = vmatprep.subr.bf16.mxu0 0
          %908 = vmatpush1.bf16.msra.mxu0 0
          %909 = vmatprep.subr.bf16.mxu0 0
          %910 = vmatpush1.bf16.msra.mxu0 0
          %911 = vmatprep.subr.bf16.mxu0 0
          %912 = vmatpush1.bf16.msra.mxu0 0
          %913 = vmatprep.mubr.bf16.mxu0 0
          %914 = vmatmul.mubr.bf16.gmra.mrb[0].mxu0 %v792
          %v915 = vpop.f32.mrb[0].mxu0
          %v916 = vadd.f32 0.0, %v915
          %v917 = vpop.f32.mrb[0].mxu0
          %v918 = vpop.f32.mrb[0].mxu0
          %v919 = vadd.f32 0.0, %v918
          %v920 = vpop.f32.mrb[0].mxu0
          %921 = vmatprep.mubr.bf16.mxu0 0
          %922 = vmatmul.mubr.bf16.gmra.mrb[0].mxu0 %v793
          %v923 = vpop.f32.mrb[0].mxu0
          %v924 = vadd.f32 0.0, %v923
          %v925 = vpop.f32.mrb[0].mxu0
          %v926 = vpop.f32.mrb[0].mxu0
          %v927 = vadd.f32 0.0, %v926
          %v928 = vpop.f32.mrb[0].mxu0
          %929 = vdwg.mxu0
          %v934 = vunpack.c.l.b16 %v794
          %v935 = vunpack.c.l.b16 %v795
          %v936 = vunpack.c.l.b16 %v796
          %v937 = vunpack.c.l.b16 %v797
          %v938 = vpack.c.b16 %v935, %v934
          %v939 = vpack.c.b16 %v937, %v936
          %v958 = vunpack.c.l.b16 %v798
          %v959 = vunpack.c.l.b16 %v799
          %v960 = vunpack.c.l.b16 %v800
          %v961 = vunpack.c.l.b16 %v801
          %v962 = vunpack.c.l.b16 %v802
          %v963 = vunpack.c.l.b16 %v803
          %v964 = vunpack.c.l.b16 %v804
          %v965 = vunpack.c.l.b16 %v805
          %v966 = vunpack.c.l.b16 %v806
          %v967 = vunpack.c.l.b16 %v807
          %v968 = vunpack.c.l.b16 %v808
          %v969 = vunpack.c.l.b16 %v809
          %v970 = vunpack.c.l.b16 %v810
          %v971 = vunpack.c.l.b16 %v811
          %v972 = vunpack.c.l.b16 %v812
          %v973 = vunpack.c.l.b16 %v813
          %v974 = vpack.c.b16 %v959, %v958
          %v975 = vpack.c.b16 %v961, %v960
          %v976 = vpack.c.b16 %v963, %v962
          %v977 = vpack.c.b16 %v965, %v964
          %v978 = vpack.c.b16 %v967, %v966
          %v979 = vpack.c.b16 %v969, %v968
          %v980 = vpack.c.b16 %v971, %v970
          %v981 = vpack.c.b16 %v973, %v972
          %990 = vmatprep.subr.bf16.mxu0 0
          %991 = vmatpush1.bf16.msra.mxu0 %v974
          %992 = vmatprep.subr.bf16.mxu0 0
          %993 = vmatpush1.bf16.msra.mxu0 %v975
          %994 = vmatprep.subr.bf16.mxu0 0
          %995 = vmatpush1.bf16.msra.mxu0 %v976
          %996 = vmatprep.subr.bf16.mxu0 0
          %997 = vmatpush1.bf16.msra.mxu0 %v977
          %998 = vmatprep.subr.bf16.mxu0 0
          %999 = vmatpush1.bf16.msra.mxu0 %v978
          %1000 = vmatprep.subr.bf16.mxu0 0
          %1001 = vmatpush1.bf16.msra.mxu0 %v979
          %1002 = vmatprep.subr.bf16.mxu0 0
          %1003 = vmatpush1.bf16.msra.mxu0 %v980
          %1004 = vmatprep.subr.bf16.mxu0 0
          %1005 = vmatpush1.bf16.msra.mxu0 %v981
          %1006 = vmatprep.subr.bf16.mxu0 0
          %1007 = vmatpush1.bf16.msra.mxu0 0
          %1008 = vmatprep.subr.bf16.mxu0 0
          %1009 = vmatpush1.bf16.msra.mxu0 0
          %1010 = vmatprep.subr.bf16.mxu0 0
          %1011 = vmatpush1.bf16.msra.mxu0 0
          %1012 = vmatprep.subr.bf16.mxu0 0
          %1013 = vmatpush1.bf16.msra.mxu0 0
          %1014 = vmatprep.subr.bf16.mxu0 0
          %1015 = vmatpush1.bf16.msra.mxu0 0
          %1016 = vmatprep.subr.bf16.mxu0 0
          %1017 = vmatpush1.bf16.msra.mxu0 0
          %1018 = vmatprep.subr.bf16.mxu0 0
          %1019 = vmatpush1.bf16.msra.mxu0 0
          %1020 = vmatprep.subr.bf16.mxu0 0
          %1021 = vmatpush1.bf16.msra.mxu0 0
          %1022 = vmatprep.mubr.bf16.mxu0 0
          %1023 = vmatmul.mubr.bf16.gmra.mrb[0].mxu0 %v938
          %v1024 = vpop.f32.mrb[0].mxu0
          %v1025 = vadd.f32 %v916, %v1024
          %v1026 = vpop.f32.mrb[0].mxu0
          %v1027 = vpop.f32.mrb[0].mxu0
          %v1028 = vadd.f32 %v919, %v1027
          %v1029 = vpop.f32.mrb[0].mxu0
          %1030 = vmatprep.mubr.bf16.mxu0 0
          %1031 = vmatmul.mubr.bf16.gmra.mrb[0].mxu0 %v939
          %v1032 = vpop.f32.mrb[0].mxu0
          %v1033 = vadd.f32 %v924, %v1032
          %v1034 = vpop.f32.mrb[0].mxu0
          %v1035 = vpop.f32.mrb[0].mxu0
          %v1036 = vadd.f32 %v927, %v1035
          %v1037 = vpop.f32.mrb[0].mxu0
          %1038 = vdwg.mxu0
          %v1040 = vlaneseq
          %v1041 = vshrl.u32 %v1040, 7
          %v1042 = vsub.s32 0, %v1041
          %v1043 = vrot.slane %v830, %v1042
          %v1045 = vadd.f32 %v1025, %v1043
          %v1046 = vadd.f32 %v1028, %v1043
          %v1047 = vadd.f32 %v1033, %v1043
          %v1048 = vadd.f32 %v1036, %v1043
          %v1049 = vlaneseq
          %v1050 = vand.u32 %v1049, 127
          %vm1051 = vcmp.lt.s32.totalorder %v1050, 64
          %v1052 = vsel %vm1051, 1, 0
          %v1053 = vcvt.s32.f32 %v1052
          %v1054 = vmul.f32 %v1045, %v1053
          %v1055 = vmul.f32 %v1046, %v1053
          %v1056 = vmul.f32 %v1047, %v1053
          %v1057 = vmul.f32 %v1048, %v1053
          %1058 = vadd.xlane.f32.xlu0 %v1054
          %v1059 = vpop.xlane.xlu0 %1058
          %1060 = vadd.xlane.f32.xlu0 %v1055
          %v1061 = vpop.xlane.xlu0 %1060
          %1062 = vadd.xlane.f32.xlu0 %v1056
          %v1063 = vpop.xlane.xlu0 %1062
          %1064 = vadd.xlane.f32.xlu0 %v1057
          %v1065 = vpop.xlane.xlu0 %1064
          %v1066 = vmul.f32 %v1059, 0.015625
          %v1067 = vmul.f32 %v1061, 0.015625
          %v1068 = vmul.f32 %v1063, 0.015625
          %v1069 = vmul.f32 %v1065, 0.015625
          %v1070 = vsub.f32 %v1045, %v1066
          %v1071 = vsub.f32 %v1046, %v1067
          %v1072 = vsub.f32 %v1047, %v1068
          %v1073 = vsub.f32 %v1048, %v1069
          %v1074 = vmul.f32 %v1070, %v1053
          %v1075 = vmul.f32 %v1071, %v1053
          %v1076 = vmul.f32 %v1072, %v1053
          %v1077 = vmul.f32 %v1073, %v1053
          %v1078 = vmul.f32 %v1074, %v1074
          %v1079 = vmul.f32 %v1075, %v1075
          %v1080 = vmul.f32 %v1076, %v1076
          %v1081 = vmul.f32 %v1077, %v1077
          %1082 = vadd.xlane.f32.xlu0 %v1078
          %v1083 = vpop.xlane.xlu0 %1082
          %1084 = vadd.xlane.f32.xlu0 %v1079
          %v1085 = vpop.xlane.xlu0 %1084
          %1086 = vadd.xlane.f32.xlu0 %v1080
          %v1087 = vpop.xlane.xlu0 %1086
          %1088 = vadd.xlane.f32.xlu0 %v1081
          %v1089 = vpop.xlane.xlu0 %1088
          %v1090 = vmul.f32 %v1083, 0.015625
          %v1091 = vmul.f32 %v1085, 0.015625
          %v1092 = vmul.f32 %v1087, 0.015625
          %v1093 = vmul.f32 %v1089, 0.015625
          %v1094 = vadd.f32 %v1090, 1e-05
          %v1095 = vadd.f32 %v1091, 1e-05
          %v1096 = vadd.f32 %v1092, 1e-05
          %v1097 = vadd.f32 %v1093, 1e-05
          %v1098 = vrsqrt.pop %v1094
          %v1099 = vrsqrt.pop %v1095
          %v1100 = vrsqrt.pop %v1096
          %v1101 = vrsqrt.pop %v1097
          %v1102 = vmul.f32 %v1074, %v1098
          %v1103 = vmul.f32 %v1075, %v1099
          %v1104 = vmul.f32 %v1076, %v1100
          %v1105 = vmul.f32 %v1077, %v1101
          %v1107 = vlaneseq
          %v1108 = vshrl.u32 %v1107, 7
          %v1109 = vsub.s32 0, %v1108
          %v1110 = vrot.slane %v831, %v1109
          %v1112 = vmul.f32 %v1102, %v1110
          %v1113 = vmul.f32 %v1103, %v1110
          %v1114 = vmul.f32 %v1104, %v1110
          %v1115 = vmul.f32 %v1105, %v1110
          %v1117 = vlaneseq
          %v1118 = vshrl.u32 %v1117, 7
          %v1119 = vsub.s32 0, %v1118
          %v1120 = vrot.slane %v832, %v1119
          %v1122 = vadd.f32 %v1112, %v1120
          %v1123 = vadd.f32 %v1113, %v1120
          %v1124 = vadd.f32 %v1114, %v1120
          %v1125 = vadd.f32 %v1115, %v1120
          %v1126 = vmax.f32 %v1122, 0.0
          %v1127 = vmax.f32 %v1123, 0.0
          %v1128 = vmax.f32 %v1124, 0.0
          %v1129 = vmax.f32 %v1125, 0.0
          %v1130 = vpack.c.bf16 %v1127, %v1126
          %v1131 = vpack.c.bf16 %v1129, %v1128
          %v1132 = vld [vmem:[%s9] sm:$0xf]
          %v1133 = vld [vmem:[%s9 + $0x4] sm:$0xf]
          %v1134 = vld [vmem:[%s9 + $0x8] sm:$0xf]
          %v1135 = vld [vmem:[%s9 + $0xc] sm:$0xf]
          %v1136 = vld [vmem:[%s9 + $0x10] sm:$0xf]
          %v1137 = vld [vmem:[%s9 + $0x14] sm:$0xf]
          %v1138 = vld [vmem:[%s9 + $0x18] sm:$0xf]
          %v1139 = vld [vmem:[%s9 + $0x1c] sm:$0xf]
          %v1140 = vld [vmem:[%s9 + $0x20] sm:$0xf]
          %v1141 = vld [vmem:[%s9 + $0x24] sm:$0xf]
          %v1142 = vld [vmem:[%s9 + $0x28] sm:$0xf]
          %v1143 = vld [vmem:[%s9 + $0x2c] sm:$0xf]
          %v1144 = vld [vmem:[%s9 + $0x30] sm:$0xf]
          %v1145 = vld [vmem:[%s9 + $0x34] sm:$0xf]
          %v1146 = vld [vmem:[%s9 + $0x38] sm:$0xf]
          %v1147 = vld [vmem:[%s9 + $0x3c] sm:$0xf]
          %v1148 = vld [vmem:[%s10] sm:$0xf]
          %v1149 = vld [vmem:[%s10 + $0x4] sm:$0xf]
          %v1150 = vld [vmem:[%s10 + $0x8] sm:$0xf]
          %v1151 = vld [vmem:[%s10 + $0xc] sm:$0xf]
          %v1152 = vld [vmem:[%s10 + $0x10] sm:$0xf]
          %v1153 = vld [vmem:[%s10 + $0x14] sm:$0xf]
          %v1154 = vld [vmem:[%s10 + $0x18] sm:$0xf]
          %v1155 = vld [vmem:[%s10 + $0x1c] sm:$0xf]
          %v1156 = vld [vmem:[%s10 + $0x20] sm:$0xf]
          %v1157 = vld [vmem:[%s10 + $0x24] sm:$0xf]
          %v1158 = vld [vmem:[%s10 + $0x28] sm:$0xf]
          %v1159 = vld [vmem:[%s10 + $0x2c] sm:$0xf]
          %v1160 = vld [vmem:[%s10 + $0x30] sm:$0xf]
          %v1161 = vld [vmem:[%s10 + $0x34] sm:$0xf]
          %v1162 = vld [vmem:[%s10 + $0x38] sm:$0xf]
          %v1163 = vld [vmem:[%s10 + $0x3c] sm:$0xf]
          %v1164 = vld [vmem:[%s11] sm:$0x1]
          %v1165 = vld [vmem:[%s12] sm:$0x1]
          %v1166 = vld [vmem:[%s13] sm:$0x1]
          %v1183 = vunpack.c.l.b16 %v1148
          %v1184 = vunpack.c.l.b16 %v1149
          %v1185 = vunpack.c.l.b16 %v1150
          %v1186 = vunpack.c.l.b16 %v1151
          %v1187 = vunpack.c.l.b16 %v1152
          %v1188 = vunpack.c.l.b16 %v1153
          %v1189 = vunpack.c.l.b16 %v1154
          %v1190 = vunpack.c.l.b16 %v1155
          %v1191 = vunpack.c.l.b16 %v1156
          %v1192 = vunpack.c.l.b16 %v1157
          %v1193 = vunpack.c.l.b16 %v1158
          %v1194 = vunpack.c.l.b16 %v1159
          %v1195 = vunpack.c.l.b16 %v1160
          %v1196 = vunpack.c.l.b16 %v1161
          %v1197 = vunpack.c.l.b16 %v1162
          %v1198 = vunpack.c.l.b16 %v1163
          %v1199 = vpack.c.b16 %v1184, %v1183
          %v1200 = vpack.c.b16 %v1186, %v1185
          %v1201 = vpack.c.b16 %v1188, %v1187
          %v1202 = vpack.c.b16 %v1190, %v1189
          %v1203 = vpack.c.b16 %v1192, %v1191
          %v1204 = vpack.c.b16 %v1194, %v1193
          %v1205 = vpack.c.b16 %v1196, %v1195
          %v1206 = vpack.c.b16 %v1198, %v1197
          %1215 = vmatprep.subr.bf16.mxu0 0
          %1216 = vmatpush1.bf16.msra.mxu0 %v1199
          %1217 = vmatprep.subr.bf16.mxu0 0
          %1218 = vmatpush1.bf16.msra.mxu0 %v1200
          %1219 = vmatprep.subr.bf16.mxu0 0
          %1220 = vmatpush1.bf16.msra.mxu0 %v1201
          %1221 = vmatprep.subr.bf16.mxu0 0
          %1222 = vmatpush1.bf16.msra.mxu0 %v1202
          %1223 = vmatprep.subr.bf16.mxu0 0
          %1224 = vmatpush1.bf16.msra.mxu0 %v1203
          %1225 = vmatprep.subr.bf16.mxu0 0
          %1226 = vmatpush1.bf16.msra.mxu0 %v1204
          %1227 = vmatprep.subr.bf16.mxu0 0
          %1228 = vmatpush1.bf16.msra.mxu0 %v1205
          %1229 = vmatprep.subr.bf16.mxu0 0
          %1230 = vmatpush1.bf16.msra.mxu0 %v1206
          %1231 = vmatprep.subr.bf16.mxu0 0
          %1232 = vmatpush1.bf16.msra.mxu0 0
          %1233 = vmatprep.subr.bf16.mxu0 0
          %1234 = vmatpush1.bf16.msra.mxu0 0
          %1235 = vmatprep.subr.bf16.mxu0 0
          %1236 = vmatpush1.bf16.msra.mxu0 0
          %1237 = vmatprep.subr.bf16.mxu0 0
          %1238 = vmatpush1.bf16.msra.mxu0 0
          %1239 = vmatprep.subr.bf16.mxu0 0
          %1240 = vmatpush1.bf16.msra.mxu0 0
          %1241 = vmatprep.subr.bf16.mxu0 0
          %1242 = vmatpush1.bf16.msra.mxu0 0
          %1243 = vmatprep.subr.bf16.mxu0 0
          %1244 = vmatpush1.bf16.msra.mxu0 0
          %1245 = vmatprep.subr.bf16.mxu0 0
          %1246 = vmatpush1.bf16.msra.mxu0 0
          %1247 = vmatprep.mubr.bf16.mxu0 0
          %1248 = vmatmul.mubr.bf16.gmra.mrb[0].mxu0 %v792
          %v1249 = vpop.f32.mrb[0].mxu0
          %v1250 = vadd.f32 0.0, %v1249
          %v1251 = vpop.f32.mrb[0].mxu0
          %v1252 = vpop.f32.mrb[0].mxu0
          %v1253 = vadd.f32 0.0, %v1252
          %v1254 = vpop.f32.mrb[0].mxu0
          %1255 = vmatprep.mubr.bf16.mxu0 0
          %1256 = vmatmul.mubr.bf16.gmra.mrb[0].mxu0 %v793
          %v1257 = vpop.f32.mrb[0].mxu0
          %v1258 = vadd.f32 0.0, %v1257
          %v1259 = vpop.f32.mrb[0].mxu0
          %v1260 = vpop.f32.mrb[0].mxu0
          %v1261 = vadd.f32 0.0, %v1260
          %v1262 = vpop.f32.mrb[0].mxu0
          %1263 = vdwg.mxu0
          %v1280 = vunpack.c.l.b16 %v1132
          %v1281 = vunpack.c.l.b16 %v1133
          %v1282 = vunpack.c.l.b16 %v1134
          %v1283 = vunpack.c.l.b16 %v1135
          %v1284 = vunpack.c.l.b16 %v1136
          %v1285 = vunpack.c.l.b16 %v1137
          %v1286 = vunpack.c.l.b16 %v1138
          %v1287 = vunpack.c.l.b16 %v1139
          %v1288 = vunpack.c.l.b16 %v1140
          %v1289 = vunpack.c.l.b16 %v1141
          %v1290 = vunpack.c.l.b16 %v1142
          %v1291 = vunpack.c.l.b16 %v1143
          %v1292 = vunpack.c.l.b16 %v1144
          %v1293 = vunpack.c.l.b16 %v1145
          %v1294 = vunpack.c.l.b16 %v1146
          %v1295 = vunpack.c.l.b16 %v1147
          %v1296 = vpack.c.b16 %v1281, %v1280
          %v1297 = vpack.c.b16 %v1283, %v1282
          %v1298 = vpack.c.b16 %v1285, %v1284
          %v1299 = vpack.c.b16 %v1287, %v1286
          %v1300 = vpack.c.b16 %v1289, %v1288
          %v1301 = vpack.c.b16 %v1291, %v1290
          %v1302 = vpack.c.b16 %v1293, %v1292
          %v1303 = vpack.c.b16 %v1295, %v1294
          %1312 = vmatprep.subr.bf16.mxu0 0
          %1313 = vmatpush1.bf16.msra.mxu0 %v1296
          %1314 = vmatprep.subr.bf16.mxu0 0
          %1315 = vmatpush1.bf16.msra.mxu0 %v1297
          %1316 = vmatprep.subr.bf16.mxu0 0
          %1317 = vmatpush1.bf16.msra.mxu0 %v1298
          %1318 = vmatprep.subr.bf16.mxu0 0
          %1319 = vmatpush1.bf16.msra.mxu0 %v1299
          %1320 = vmatprep.subr.bf16.mxu0 0
          %1321 = vmatpush1.bf16.msra.mxu0 %v1300
          %1322 = vmatprep.subr.bf16.mxu0 0
          %1323 = vmatpush1.bf16.msra.mxu0 %v1301
          %1324 = vmatprep.subr.bf16.mxu0 0
          %1325 = vmatpush1.bf16.msra.mxu0 %v1302
          %1326 = vmatprep.subr.bf16.mxu0 0
          %1327 = vmatpush1.bf16.msra.mxu0 %v1303
          %1328 = vmatprep.subr.bf16.mxu0 0
          %1329 = vmatpush1.bf16.msra.mxu0 0
          %1330 = vmatprep.subr.bf16.mxu0 0
          %1331 = vmatpush1.bf16.msra.mxu0 0
          %1332 = vmatprep.subr.bf16.mxu0 0
          %1333 = vmatpush1.bf16.msra.mxu0 0
          %1334 = vmatprep.subr.bf16.mxu0 0
          %1335 = vmatpush1.bf16.msra.mxu0 0
          %1336 = vmatprep.subr.bf16.mxu0 0
          %1337 = vmatpush1.bf16.msra.mxu0 0
          %1338 = vmatprep.subr.bf16.mxu0 0
          %1339 = vmatpush1.bf16.msra.mxu0 0
          %1340 = vmatprep.subr.bf16.mxu0 0
          %1341 = vmatpush1.bf16.msra.mxu0 0
          %1342 = vmatprep.subr.bf16.mxu0 0
          %1343 = vmatpush1.bf16.msra.mxu0 0
          %1344 = vmatprep.mubr.bf16.mxu0 0
          %1345 = vmatmul.mubr.bf16.gmra.mrb[0].mxu0 %v1130
          %v1346 = vpop.f32.mrb[0].mxu0
          %v1347 = vadd.f32 %v1250, %v1346
          %v1348 = vpop.f32.mrb[0].mxu0
          %v1349 = vpop.f32.mrb[0].mxu0
          %v1350 = vadd.f32 %v1253, %v1349
          %v1351 = vpop.f32.mrb[0].mxu0
          %1352 = vmatprep.mubr.bf16.mxu0 0
          %1353 = vmatmul.mubr.bf16.gmra.mrb[0].mxu0 %v1131
          %v1354 = vpop.f32.mrb[0].mxu0
          %v1355 = vadd.f32 %v1258, %v1354
          %v1356 = vpop.f32.mrb[0].mxu0
          %v1357 = vpop.f32.mrb[0].mxu0
          %v1358 = vadd.f32 %v1261, %v1357
          %v1359 = vpop.f32.mrb[0].mxu0
          %1360 = vdwg.mxu0
          %v1362 = vlaneseq
          %v1363 = vshrl.u32 %v1362, 7
          %v1364 = vsub.s32 0, %v1363
          %v1365 = vrot.slane %v1164, %v1364
          %v1367 = vadd.f32 %v1347, %v1365
          %v1368 = vadd.f32 %v1350, %v1365
          %v1369 = vadd.f32 %v1355, %v1365
          %v1370 = vadd.f32 %v1358, %v1365
          %vm1371 = vcmp.lt.s32.totalorder %v1050, 32
          %v1372 = vsel %vm1371, 1, 0
          %v1373 = vcvt.s32.f32 %v1372
          %v1374 = vmul.f32 %v1367, %v1373
          %v1375 = vmul.f32 %v1368, %v1373
          %v1376 = vmul.f32 %v1369, %v1373
          %v1377 = vmul.f32 %v1370, %v1373
          %1378 = vadd.xlane.f32.xlu0 %v1374
          %v1379 = vpop.xlane.xlu0 %1378
          %1380 = vadd.xlane.f32.xlu0 %v1375
          %v1381 = vpop.xlane.xlu0 %1380
          %1382 = vadd.xlane.f32.xlu0 %v1376
          %v1383 = vpop.xlane.xlu0 %1382
          %1384 = vadd.xlane.f32.xlu0 %v1377
          %v1385 = vpop.xlane.xlu0 %1384
          %v1386 = vmul.f32 %v1379, 0.03125
          %v1387 = vmul.f32 %v1381, 0.03125
          %v1388 = vmul.f32 %v1383, 0.03125
          %v1389 = vmul.f32 %v1385, 0.03125
          %v1390 = vsub.f32 %v1367, %v1386
          %v1391 = vsub.f32 %v1368, %v1387
          %v1392 = vsub.f32 %v1369, %v1388
          %v1393 = vsub.f32 %v1370, %v1389
          %v1394 = vmul.f32 %v1390, %v1373
          %v1395 = vmul.f32 %v1391, %v1373
          %v1396 = vmul.f32 %v1392, %v1373
          %v1397 = vmul.f32 %v1393, %v1373
          %v1398 = vmul.f32 %v1394, %v1394
          %v1399 = vmul.f32 %v1395, %v1395
          %v1400 = vmul.f32 %v1396, %v1396
          %v1401 = vmul.f32 %v1397, %v1397
          %1402 = vadd.xlane.f32.xlu0 %v1398
          %v1403 = vpop.xlane.xlu0 %1402
          %1404 = vadd.xlane.f32.xlu0 %v1399
          %v1405 = vpop.xlane.xlu0 %1404
          %1406 = vadd.xlane.f32.xlu0 %v1400
          %v1407 = vpop.xlane.xlu0 %1406
          %1408 = vadd.xlane.f32.xlu0 %v1401
          %v1409 = vpop.xlane.xlu0 %1408
          %v1410 = vmul.f32 %v1403, 0.03125
          %v1411 = vmul.f32 %v1405, 0.03125
          %v1412 = vmul.f32 %v1407, 0.03125
          %v1413 = vmul.f32 %v1409, 0.03125
          %v1414 = vadd.f32 %v1410, 1e-05
          %v1415 = vadd.f32 %v1411, 1e-05
          %v1416 = vadd.f32 %v1412, 1e-05
          %v1417 = vadd.f32 %v1413, 1e-05
          %v1418 = vrsqrt.pop %v1414
          %v1419 = vrsqrt.pop %v1415
          %v1420 = vrsqrt.pop %v1416
          %v1421 = vrsqrt.pop %v1417
          %v1422 = vmul.f32 %v1394, %v1418
          %v1423 = vmul.f32 %v1395, %v1419
          %v1424 = vmul.f32 %v1396, %v1420
          %v1425 = vmul.f32 %v1397, %v1421
          %v1427 = vlaneseq
          %v1428 = vshrl.u32 %v1427, 7
          %v1429 = vsub.s32 0, %v1428
          %v1430 = vrot.slane %v1165, %v1429
          %v1432 = vmul.f32 %v1422, %v1430
          %v1433 = vmul.f32 %v1423, %v1430
          %v1434 = vmul.f32 %v1424, %v1430
          %v1435 = vmul.f32 %v1425, %v1430
          %v1437 = vlaneseq
          %v1438 = vshrl.u32 %v1437, 7
          %v1439 = vsub.s32 0, %v1438
          %v1440 = vrot.slane %v1166, %v1439
          %v1442 = vadd.f32 %v1432, %v1440
          %v1443 = vadd.f32 %v1433, %v1440
          %v1444 = vadd.f32 %v1434, %v1440
          %v1445 = vadd.f32 %v1435, %v1440
          %v1446 = vmax.f32 %v1442, 0.0
          %v1447 = vmax.f32 %v1443, 0.0
          %v1448 = vmax.f32 %v1444, 0.0
          %v1449 = vmax.f32 %v1445, 0.0
          %1450 = vst [vmem:[%s604] sm:$0xff] %v1446
          %1451 = vst [vmem:[%s604 + $0x8] sm:$0xff] %v1447
          %1452 = vst [vmem:[%s604 + $0x10] sm:$0xff] %v1448
          %1453 = vst [vmem:[%s604 + $0x18] sm:$0xff] %v1449
        $region125: #{forward.1} parent=112 // pred_fallthru
          _
        %s1454 = smul.u32 4, %s29
        %p1455 = scmp.lt.s32.totalorder %s1454, 7
        %s1456 = scalar_select %p1455, %s1454, 7
        %s1457 = smul.addr %s1456, 8
        %s1458 = scalar_lea.vmem %s14, %s1457
        // Predicated region
        $region126: #{forward.1} parent=112 // pred_check
          %p1459 = pneg %p371
        $region127: #{forward.1} parent=112 // pred_check_branch
          %1461 = sbr.rel (%p1459) target = $region129
        $region128: #{forward.1} parent=112 // pred_region
          %s1462 = smul.u32 4, %s29
        $region129: #{forward.1} parent=112 // pred_fallthru
          _
      $region113: #{forward.1} parent=5 // pred_fallthru
        _
      %p1463 = scmp.le.s32.totalorder 2, %s20
      // Predicated region
      $region130: #{forward.1} parent=5 // pred_check
        %p1464 = pneg %p1463
      $region131: #{forward.1} parent=5 // pred_check_branch
        %1466 = sbr.rel (%p1464) target = $region133
      $region132: #{forward.1} parent=5 // pred_region
        %s1467 = ssub.s32 %s20, 2
        // Predicated region
        $region134: #{forward.1} parent=132 // pred_check
          %p1468 = pneg %p377
        $region135: #{forward.1} parent=132 // pred_check_branch
          %1470 = sbr.rel (%p1468) target = $region137
        $region136: #{forward.1} parent=132 // pred_region
          %s1471 = smul.u32 4, %s31
          %p1472 = scmp.lt.s32.totalorder %s1471, 7
          %s1473 = scalar_select %p1472, %s1471, 7
          %s1474 = smul.addr %s1473, 8
          %s1475 = scalar_lea.vmem %s14, %s1474
        $region137: #{forward.1} parent=132 // pred_fallthru
          _
      $region133: #{forward.1} parent=5 // pred_fallthru
        _
    $region6: #{forward.1} parent=1 // loop_footer
      %s24 = sadd.s32 1, %s20
    $region7: #{forward.1} parent=1 // loop_footer_branch
      %19 = sbr.rel target = $region3
    $region8: #{forward.1} parent=1 // loop_exit
      _

</llo_original>
